<compile_context>
chip_gen: v5e
topology: v5e:2x2
jax: 0.10.0
libtpu: 0.0.40
codegen_flags: <defaults>
</compile_context>

<pallas_src>
import functools

import jax
import jax.numpy as jnp
from jax.experimental import pallas as pl
from jax.experimental.pallas import tpu as pltpu


def _round_up(n, m):
    return ((n + m - 1) // m) * m


def _progression_kernel(x_ref, obs_ref, w_ih_ref, b_ih_ref, w_rec_ref,
                        b_rec_ref, w_out_ref, b_out_ref, z_ref, hid_ref,
                        *, gate_pad):
    """GRU progression over the full sequence; batch-major, lane-padded layout.

    Shapes (all lane dims are multiples of 128):
      x_ref     [B, L, DP]          obs_ref  [B, L]
      w_ih_ref  [DP, 3*GP]          b_ih_ref [1, 3*GP]
      w_rec_ref [HP, 6*GP]          b_rec_ref[1, 6*GP]   (= [w_hh | w_out@w_ih])
      w_out_ref [HP, DP]            b_out_ref[1, DP]
      z_ref     [B, L, DP]          hid_ref  [B, L, HP]
    """
    GP = gate_pad
    B, L, DP = x_ref.shape
    HP = w_rec_ref.shape[0]

    # ---- loop-invariant loads (hoisted out of the recurrence) --------------
    x = x_ref[...]                        # [B, L, DP]
    obs = obs_ref[...]                    # [B, L]  (col 0 pre-forced to 1.0)
    w_ih = w_ih_ref[...]                  # [DP, 3GP]
    b_ih = b_ih_ref[...]                  # [1, 3GP]
    w_rec = w_rec_ref[...]                # [HP, 6GP]
    b_rec = b_rec_ref[...]                # [1, 6GP]

    # ---- input projection for ALL steps in one MXU call --------------------
    gx = jnp.dot(x.reshape(B * L, DP), w_ih,
                 preferred_element_type=jnp.float32).reshape(B, L, 3 * GP)

    # ---- hoist observation masking off the serial chain --------------------
    ogx = obs[:, :, None] * gx + b_ih     # [B, L, 3GP]
    om = (1.0 - obs)[:, :, None]          # [B, L, 1]

    # ---- serial recurrence: fully unrolled, ONE matmul per step ------------
    # h is carried lane-padded to HP; pad lanes stay exactly 0 (all padded
    # weight/bias columns and rows are 0, and h starts at 0).
    h = jnp.zeros((B, HP), jnp.float32)
    h_list = [h]                          # hidden[:, 0] = init history = 0
    for s in range(1, L):
        rec = jnp.dot(h, w_rec, preferred_element_type=jnp.float32) + b_rec
        gh = rec[:, :3 * GP]              # h @ w_hh + b_hh         (aligned)
        gp = rec[:, 3 * GP:]              # (h @ w_out + b_out)@w_ih (aligned)
        gi = ogx[:, s - 1, :] + om[:, s - 1, :] * gp
        gs = gi + gh
        # GRUCell gates (PyTorch ordering: r, z, n); each in its own 128-lane slot
        r = jax.nn.sigmoid(gs[:, :GP])
        u = jax.nn.sigmoid(gs[:, GP:2 * GP])
        n = jnp.tanh(gi[:, 2 * GP:] + r * gh[:, 2 * GP:])
        h = (1.0 - u) * n + u * h         # [B, HP]
        h_list.append(h)

    # ---- single lane-dense store of the hidden history ---------------------
    h_all = jnp.stack(h_list, axis=1)     # [B, L, HP]  (in registers)
    hid_ref[...] = h_all

    # ---- output projection for ALL steps in one MXU call (no VMEM readback)
    w_out = w_out_ref[...]                # [HP, DP]
    b_out = b_out_ref[...]                # [1, DP]
    z_pred = (jnp.dot(h_all.reshape(B * L, HP), w_out,
                      preferred_element_type=jnp.float32)
              + b_out).reshape(B, L, DP)

    # z[:, 0] = x[:, 0]; single lane-dense store.
    step_idx = jax.lax.broadcasted_iota(jnp.int32, (B, L, DP), 1)
    z_ref[...] = jnp.where(step_idx == 0, x, z_pred)


def _pad_gate_cols(w, H, GP):
    """[R, 3H] -> [R, 3*GP]: each gate's columns in its own GP-lane slot."""
    R = w.shape[0]
    out = jnp.zeros((R, 3 * GP), w.dtype)
    for g in range(3):
        out = out.at[:, g * GP:g * GP + H].set(w[:, g * H:(g + 1) * H])
    return out


def _pad_rows(w, RP):
    R = w.shape[0]
    return jnp.zeros((RP,) + w.shape[1:], w.dtype).at[:R].set(w)


def neural_progression_forward(x, observed, params):
    """x: [B, L, D] float, observed: [B, L] {0,1}. Returns (z, hidden)."""
    B, L, D = x.shape
    H = params["w_hh"].shape[0]
    GP = _round_up(H, 128)     # per-gate lane slot
    HP = _round_up(H, 128)     # padded hidden dim
    DP = _round_up(D, 128)     # padded risk dim

    f32 = jnp.float32
    x = x.astype(f32)
    obs = observed.astype(f32)
    # Step-0 input is x[:, 0] unconditionally in the reference (obs[:, 0] unused),
    # so force it to "observed" for the uniform hoisted-masking formulation.
    obs_eff = obs.at[:, 0].set(1.0)

    w_ih = params["w_ih"].astype(f32)     # [D, 3H]
    w_hh = params["w_hh"].astype(f32)     # [H, 3H]
    b_ih = params["b_ih"].astype(f32)     # [1, 3H]
    b_hh = params["b_hh"].astype(f32)     # [1, 3H]
    w_out = params["w_out"].astype(f32)   # [H, D]
    b_out = params["b_out"].astype(f32)   # [1, D]

    # Fold the output projection into the recurrent matmul (done ONCE here):
    #   pred @ w_ih = h @ (w_out @ w_ih) + b_out @ w_ih
    w_px = w_out @ w_ih                   # [H, 3H]
    b_px = b_out @ w_ih                   # [1, 3H]

    # Lane-aligned, zero-padded operand layouts.
    x_p = jnp.zeros((B, L, DP), f32).at[:, :, :D].set(x)
    w_ih_p = _pad_rows(_pad_gate_cols(w_ih, H, GP), DP)            # [DP, 3GP]
    b_ih_p = _pad_gate_cols(b_ih, H, GP)                           # [1, 3GP]
    w_rec = jnp.concatenate([_pad_rows(_pad_gate_cols(w_hh, H, GP), HP),
                             _pad_rows(_pad_gate_cols(w_px, H, GP), HP)],
                            axis=1)                                # [HP, 6GP]
    b_rec = jnp.concatenate([_pad_gate_cols(b_hh, H, GP),
                             _pad_gate_cols(b_px, H, GP)], axis=1)  # [1, 6GP]
    w_out_p = jnp.zeros((HP, DP), f32).at[:H, :D].set(w_out)       # [HP, DP]
    b_out_p = jnp.zeros((1, DP), f32).at[:, :D].set(b_out)         # [1, DP]

    kernel = functools.partial(_progression_kernel, gate_pad=GP)
    vmem = pl.BlockSpec(memory_space=pltpu.MemorySpace.VMEM)

    z_p, hid_p = pl.pallas_call(
        kernel,
        out_shape=(jax.ShapeDtypeStruct((B, L, DP), f32),
                   jax.ShapeDtypeStruct((B, L, HP), f32)),
        in_specs=[vmem] * 8,
        out_specs=(vmem, vmem),
    )(x_p, obs_eff, w_ih_p, b_ih_p, w_rec, b_rec, w_out_p, b_out_p)

    # Strip the lane padding (layout plumbing outside the kernel).
    return z_p[:, :, :D], hid_p[:, :, :H]


def _reference_forward(x, observed, params):
    """Pure-JAX replica of the original (un-fused) forward, for verification."""
    B, L, D = x.shape
    H = params["w_hh"].shape[0]
    x = x.astype(jnp.float32)
    obs = observed.astype(jnp.float32)

    inp = x[:, 0, :]
    h = jnp.zeros((B, H), jnp.float32)
    z_list = [inp]
    hid_list = [h]
    for step in range(1, L):
        gi = inp @ params["w_ih"] + params["b_ih"]
        gh = h @ params["w_hh"] + params["b_hh"]
        r = jax.nn.sigmoid(gi[:, 0:H] + gh[:, 0:H])
        u = jax.nn.sigmoid(gi[:, H:2 * H] + gh[:, H:2 * H])
        n = jnp.tanh(gi[:, 2 * H:3 * H] + r * gh[:, 2 * H:3 * H])
        h = (1.0 - u) * n + u * h
        pred = h @ params["w_out"] + params["b_out"]
        z_list.append(pred)
        hid_list.append(h)
        o = obs[:, step][:, None]
        inp = o * x[:, step, :] + (1.0 - o) * pred
    z = jnp.stack(z_list, axis=1)
    hidden = jnp.stack(hid_list, axis=1)
    return z, hidden


def _init_params(key, D, H):
    """Deterministic synthetic weights (PyTorch-style uniform(-1/sqrt(H), 1/sqrt(H)))."""
    ks = jax.random.split(key, 6)
    s = 1.0 / jnp.sqrt(jnp.float32(H))
    return {
        "w_ih": jax.random.uniform(ks[0], (D, 3 * H), jnp.float32, -s, s),
        "w_hh": jax.random.uniform(ks[1], (H, 3 * H), jnp.float32, -s, s),
        "b_ih": jax.random.uniform(ks[2], (1, 3 * H), jnp.float32, -s, s),
        "b_hh": jax.random.uniform(ks[3], (1, 3 * H), jnp.float32, -s, s),
        "w_out": jax.random.uniform(ks[4], (H, D), jnp.float32, -s, s),
        "b_out": jax.random.uniform(ks[5], (1, D), jnp.float32, -s, s),
    }


if __name__ == "__main__":
    # Small shapes implied by the forward:
    #   B = batch, L = max_steps, D = risk_dimension, H = hidden_dim
    B, L, D, H = 2, 8, 4, 32

    key = jax.random.PRNGKey(0)
    k_x, k_obs, k_p = jax.random.split(key, 3)

    x = jax.random.uniform(k_x, (B, L, D), jnp.float32)          # risks in [0, 1)
    observed = (jax.random.uniform(k_obs, (B, L)) > 0.3).astype(jnp.float32)
    observed = observed.at[:, 0].set(1.0)                        # first step observed
    x = x * observed[:, :, None]                                 # 0s for unobserved

    params = _init_params(k_p, D, H)

    z, hidden = neural_progression_forward(x, observed, params)
    z = jax.block_until_ready(z)
    hidden = jax.block_until_ready(hidden)

    z_ref, hidden_ref = _reference_forward(x, observed, params)
    assert z.shape == (B, L, D) and hidden.shape == (B, L, H)
    # The fused-weight reassociation differs from the reference at ~1e-6 level.
    assert jnp.allclose(z, z_ref, atol=1e-4, rtol=1e-4)
    assert jnp.allclose(hidden, hidden_ref, atol=1e-4, rtol=1e-4)

    print("KERNEL_OK")
</pallas_src>

<mosaic_0001>
module attributes {stable_mosaic.version = 11 : i64} {
  func.func @_progression_kernel(%arg0: memref<2x8x128xf32, #tpu.memory_space<vmem>>, %arg1: memref<2x8xf32, #tpu.memory_space<vmem>>, %arg2: memref<128x384xf32, #tpu.memory_space<vmem>>, %arg3: memref<1x384xf32, #tpu.memory_space<vmem>>, %arg4: memref<128x768xf32, #tpu.memory_space<vmem>>, %arg5: memref<1x768xf32, #tpu.memory_space<vmem>>, %arg6: memref<128x128xf32, #tpu.memory_space<vmem>>, %arg7: memref<1x128xf32, #tpu.memory_space<vmem>>, %arg8: memref<2x8x128xf32, #tpu.memory_space<vmem>>, %arg9: memref<2x8x128xf32, #tpu.memory_space<vmem>>) attributes {dimension_semantics = [], scalar_prefetch = 0 : i64, scratch_operands = 0 : i64, tpu.core_type = #tpu.core_type<tc>} {
    %c0 = arith.constant 0 : index
    %c0_0 = arith.constant 0 : index
    %c0_1 = arith.constant 0 : index
    %0 = vector.load %arg0[%c0, %c0_0, %c0_1] : memref<2x8x128xf32, #tpu.memory_space<vmem>>, vector<2x8x128xf32>
    %c0_2 = arith.constant 0 : index
    %c0_3 = arith.constant 0 : index
    %1 = vector.load %arg1[%c0_2, %c0_3] : memref<2x8xf32, #tpu.memory_space<vmem>>, vector<2x8xf32>
    %c0_4 = arith.constant 0 : index
    %c0_5 = arith.constant 0 : index
    %2 = vector.load %arg2[%c0_4, %c0_5] : memref<128x384xf32, #tpu.memory_space<vmem>>, vector<128x384xf32>
    %c0_6 = arith.constant 0 : index
    %c0_7 = arith.constant 0 : index
    %3 = vector.load %arg3[%c0_6, %c0_7] : memref<1x384xf32, #tpu.memory_space<vmem>>, vector<1x384xf32>
    %c0_8 = arith.constant 0 : index
    %c0_9 = arith.constant 0 : index
    %4 = vector.load %arg4[%c0_8, %c0_9] : memref<128x768xf32, #tpu.memory_space<vmem>>, vector<128x768xf32>
    %c0_10 = arith.constant 0 : index
    %c0_11 = arith.constant 0 : index
    %5 = vector.load %arg5[%c0_10, %c0_11] : memref<1x768xf32, #tpu.memory_space<vmem>>, vector<1x768xf32>
    %6 = vector.shape_cast %0 : vector<2x8x128xf32> to vector<16x128xf32>
    %cst = arith.constant dense<0.000000e+00> : vector<16x384xf32>
    %7 = tpu.matmul %6, %2, %cst {dimension_numbers = #tpu.dot_dimension_numbers<[1], [0], [0], [1], [0, 0, 1, 1], [], []>} : vector<16x128xf32>, vector<128x384xf32>, vector<16x384xf32> -> vector<16x384xf32>
    %8 = vector.shape_cast %7 : vector<16x384xf32> to vector<2x8x384xf32>
    %9 = vector.shape_cast %1 : vector<2x8xf32> to vector<2x8x1xf32>
    %10 = vector.broadcast %9 : vector<2x8x1xf32> to vector<2x8x384xf32>
    %11 = arith.mulf %10, %8 : vector<2x8x384xf32>
    %12 = vector.shape_cast %3 : vector<1x384xf32> to vector<1x1x384xf32>
    %13 = vector.broadcast %12 : vector<1x1x384xf32> to vector<2x8x384xf32>
    %14 = arith.addf %11, %13 : vector<2x8x384xf32>
    %cst_12 = arith.constant 1.000000e+00 : f32
    %15 = vector.broadcast %cst_12 : f32 to vector<2x8xf32>
    %16 = arith.subf %15, %1 : vector<2x8xf32>
    %17 = vector.shape_cast %16 : vector<2x8xf32> to vector<2x8x1xf32>
    %cst_13 = arith.constant 0.000000e+00 : f32
    %18 = vector.broadcast %cst_13 : f32 to vector<2x128xf32>
    %cst_14 = arith.constant dense<0.000000e+00> : vector<2x768xf32>
    %19 = tpu.matmul %18, %4, %cst_14 {dimension_numbers = #tpu.dot_dimension_numbers<[1], [0], [0], [1], [0, 0, 1, 1], [], []>} : vector<2x128xf32>, vector<128x768xf32>, vector<2x768xf32> -> vector<2x768xf32>
    %20 = vector.broadcast %5 : vector<1x768xf32> to vector<2x768xf32>
    %21 = arith.addf %19, %20 : vector<2x768xf32>
    %22 = vector.extract_strided_slice %21 {offsets = [0, 0], sizes = [2, 384], strides = [1, 1]} : vector<2x768xf32> to vector<2x384xf32>
    %23 = vector.extract_strided_slice %21 {offsets = [0, 384], sizes = [2, 384], strides = [1, 1]} : vector<2x768xf32> to vector<2x384xf32>
    %24 = vector.extract_strided_slice %14 {offsets = [0, 0, 0], sizes = [2, 1, 384], strides = [1, 1, 1]} : vector<2x8x384xf32> to vector<2x1x384xf32>
    %25 = vector.shape_cast %24 : vector<2x1x384xf32> to vector<2x384xf32>
    %26 = vector.extract_strided_slice %17 {offsets = [0, 0, 0], sizes = [2, 1, 1], strides = [1, 1, 1]} : vector<2x8x1xf32> to vector<2x1x1xf32>
    %27 = vector.shape_cast %26 : vector<2x1x1xf32> to vector<2x1xf32>
    %28 = vector.broadcast %27 : vector<2x1xf32> to vector<2x384xf32>
    %29 = arith.mulf %28, %23 : vector<2x384xf32>
    %30 = arith.addf %25, %29 : vector<2x384xf32>
    %31 = arith.addf %30, %22 : vector<2x384xf32>
    %32 = vector.extract_strided_slice %31 {offsets = [0, 0], sizes = [2, 128], strides = [1, 1]} : vector<2x384xf32> to vector<2x128xf32>
    %33 = arith.negf %32 : vector<2x128xf32>
    %34 = math.exp %33 : vector<2x128xf32>
    %cst_15 = arith.constant 1.000000e+00 : f32
    %35 = vector.broadcast %cst_15 : f32 to vector<2x128xf32>
    %36 = arith.addf %35, %34 : vector<2x128xf32>
    %37 = arith.divf %35, %36 : vector<2x128xf32>
    %38 = vector.extract_strided_slice %31 {offsets = [0, 128], sizes = [2, 128], strides = [1, 1]} : vector<2x384xf32> to vector<2x128xf32>
    %39 = arith.negf %38 : vector<2x128xf32>
    %40 = math.exp %39 : vector<2x128xf32>
    %cst_16 = arith.constant 1.000000e+00 : f32
    %41 = vector.broadcast %cst_16 : f32 to vector<2x128xf32>
    %42 = arith.addf %41, %40 : vector<2x128xf32>
    %43 = arith.divf %41, %42 : vector<2x128xf32>
    %44 = vector.extract_strided_slice %30 {offsets = [0, 256], sizes = [2, 128], strides = [1, 1]} : vector<2x384xf32> to vector<2x128xf32>
    %45 = vector.extract_strided_slice %22 {offsets = [0, 256], sizes = [2, 128], strides = [1, 1]} : vector<2x384xf32> to vector<2x128xf32>
    %46 = arith.mulf %37, %45 : vector<2x128xf32>
    %47 = arith.addf %44, %46 : vector<2x128xf32>
    %48 = math.tanh %47 : vector<2x128xf32>
    %cst_17 = arith.constant 1.000000e+00 : f32
    %49 = vector.broadcast %cst_17 : f32 to vector<2x128xf32>
    %50 = arith.subf %49, %43 : vector<2x128xf32>
    %51 = arith.mulf %50, %48 : vector<2x128xf32>
    %52 = arith.mulf %43, %18 : vector<2x128xf32>
    %53 = arith.addf %51, %52 : vector<2x128xf32>
    %cst_18 = arith.constant dense<0.000000e+00> : vector<2x768xf32>
    %54 = tpu.matmul %53, %4, %cst_18 {dimension_numbers = #tpu.dot_dimension_numbers<[1], [0], [0], [1], [0, 0, 1, 1], [], []>} : vector<2x128xf32>, vector<128x768xf32>, vector<2x768xf32> -> vector<2x768xf32>
    %55 = vector.broadcast %5 : vector<1x768xf32> to vector<2x768xf32>
    %56 = arith.addf %54, %55 : vector<2x768xf32>
    %57 = vector.extract_strided_slice %56 {offsets = [0, 0], sizes = [2, 384], strides = [1, 1]} : vector<2x768xf32> to vector<2x384xf32>
    %58 = vector.extract_strided_slice %56 {offsets = [0, 384], sizes = [2, 384], strides = [1, 1]} : vector<2x768xf32> to vector<2x384xf32>
    %59 = vector.extract_strided_slice %14 {offsets = [0, 1, 0], sizes = [2, 1, 384], strides = [1, 1, 1]} : vector<2x8x384xf32> to vector<2x1x384xf32>
    %60 = vector.shape_cast %59 : vector<2x1x384xf32> to vector<2x384xf32>
    %61 = vector.extract_strided_slice %17 {offsets = [0, 1, 0], sizes = [2, 1, 1], strides = [1, 1, 1]} : vector<2x8x1xf32> to vector<2x1x1xf32>
    %62 = vector.shape_cast %61 : vector<2x1x1xf32> to vector<2x1xf32>
    %63 = vector.broadcast %62 : vector<2x1xf32> to vector<2x384xf32>
    %64 = arith.mulf %63, %58 : vector<2x384xf32>
    %65 = arith.addf %60, %64 : vector<2x384xf32>
    %66 = arith.addf %65, %57 : vector<2x384xf32>
    %67 = vector.extract_strided_slice %66 {offsets = [0, 0], sizes = [2, 128], strides = [1, 1]} : vector<2x384xf32> to vector<2x128xf32>
    %68 = arith.negf %67 : vector<2x128xf32>
    %69 = math.exp %68 : vector<2x128xf32>
    %cst_19 = arith.constant 1.000000e+00 : f32
    %70 = vector.broadcast %cst_19 : f32 to vector<2x128xf32>
    %71 = arith.addf %70, %69 : vector<2x128xf32>
    %72 = arith.divf %70, %71 : vector<2x128xf32>
    %73 = vector.extract_strided_slice %66 {offsets = [0, 128], sizes = [2, 128], strides = [1, 1]} : vector<2x384xf32> to vector<2x128xf32>
    %74 = arith.negf %73 : vector<2x128xf32>
    %75 = math.exp %74 : vector<2x128xf32>
    %cst_20 = arith.constant 1.000000e+00 : f32
    %76 = vector.broadcast %cst_20 : f32 to vector<2x128xf32>
    %77 = arith.addf %76, %75 : vector<2x128xf32>
    %78 = arith.divf %76, %77 : vector<2x128xf32>
    %79 = vector.extract_strided_slice %65 {offsets = [0, 256], sizes = [2, 128], strides = [1, 1]} : vector<2x384xf32> to vector<2x128xf32>
    %80 = vector.extract_strided_slice %57 {offsets = [0, 256], sizes = [2, 128], strides = [1, 1]} : vector<2x384xf32> to vector<2x128xf32>
    %81 = arith.mulf %72, %80 : vector<2x128xf32>
    %82 = arith.addf %79, %81 : vector<2x128xf32>
    %83 = math.tanh %82 : vector<2x128xf32>
    %cst_21 = arith.constant 1.000000e+00 : f32
    %84 = vector.broadcast %cst_21 : f32 to vector<2x128xf32>
    %85 = arith.subf %84, %78 : vector<2x128xf32>
    %86 = arith.mulf %85, %83 : vector<2x128xf32>
    %87 = arith.mulf %78, %53 : vector<2x128xf32>
    %88 = arith.addf %86, %87 : vector<2x128xf32>
    %cst_22 = arith.constant dense<0.000000e+00> : vector<2x768xf32>
    %89 = tpu.matmul %88, %4, %cst_22 {dimension_numbers = #tpu.dot_dimension_numbers<[1], [0], [0], [1], [0, 0, 1, 1], [], []>} : vector<2x128xf32>, vector<128x768xf32>, vector<2x768xf32> -> vector<2x768xf32>
    %90 = vector.broadcast %5 : vector<1x768xf32> to vector<2x768xf32>
    %91 = arith.addf %89, %90 : vector<2x768xf32>
    %92 = vector.extract_strided_slice %91 {offsets = [0, 0], sizes = [2, 384], strides = [1, 1]} : vector<2x768xf32> to vector<2x384xf32>
    %93 = vector.extract_strided_slice %91 {offsets = [0, 384], sizes = [2, 384], strides = [1, 1]} : vector<2x768xf32> to vector<2x384xf32>
    %94 = vector.extract_strided_slice %14 {offsets = [0, 2, 0], sizes = [2, 1, 384], strides = [1, 1, 1]} : vector<2x8x384xf32> to vector<2x1x384xf32>
    %95 = vector.shape_cast %94 : vector<2x1x384xf32> to vector<2x384xf32>
    %96 = vector.extract_strided_slice %17 {offsets = [0, 2, 0], sizes = [2, 1, 1], strides = [1, 1, 1]} : vector<2x8x1xf32> to vector<2x1x1xf32>
    %97 = vector.shape_cast %96 : vector<2x1x1xf32> to vector<2x1xf32>
    %98 = vector.broadcast %97 : vector<2x1xf32> to vector<2x384xf32>
    %99 = arith.mulf %98, %93 : vector<2x384xf32>
    %100 = arith.addf %95, %99 : vector<2x384xf32>
    %101 = arith.addf %100, %92 : vector<2x384xf32>
    %102 = vector.extract_strided_slice %101 {offsets = [0, 0], sizes = [2, 128], strides = [1, 1]} : vector<2x384xf32> to vector<2x128xf32>
    %103 = arith.negf %102 : vector<2x128xf32>
    %104 = math.exp %103 : vector<2x128xf32>
    %cst_23 = arith.constant 1.000000e+00 : f32
    %105 = vector.broadcast %cst_23 : f32 to vector<2x128xf32>
    %106 = arith.addf %105, %104 : vector<2x128xf32>
    %107 = arith.divf %105, %106 : vector<2x128xf32>
    %108 = vector.extract_strided_slice %101 {offsets = [0, 128], sizes = [2, 128], strides = [1, 1]} : vector<2x384xf32> to vector<2x128xf32>
    %109 = arith.negf %108 : vector<2x128xf32>
    %110 = math.exp %109 : vector<2x128xf32>
    %cst_24 = arith.constant 1.000000e+00 : f32
    %111 = vector.broadcast %cst_24 : f32 to vector<2x128xf32>
    %112 = arith.addf %111, %110 : vector<2x128xf32>
    %113 = arith.divf %111, %112 : vector<2x128xf32>
    %114 = vector.extract_strided_slice %100 {offsets = [0, 256], sizes = [2, 128], strides = [1, 1]} : vector<2x384xf32> to vector<2x128xf32>
    %115 = vector.extract_strided_slice %92 {offsets = [0, 256], sizes = [2, 128], strides = [1, 1]} : vector<2x384xf32> to vector<2x128xf32>
    %116 = arith.mulf %107, %115 : vector<2x128xf32>
    %117 = arith.addf %114, %116 : vector<2x128xf32>
    %118 = math.tanh %117 : vector<2x128xf32>
    %cst_25 = arith.constant 1.000000e+00 : f32
    %119 = vector.broadcast %cst_25 : f32 to vector<2x128xf32>
    %120 = arith.subf %119, %113 : vector<2x128xf32>
    %121 = arith.mulf %120, %118 : vector<2x128xf32>
    %122 = arith.mulf %113, %88 : vector<2x128xf32>
    %123 = arith.addf %121, %122 : vector<2x128xf32>
    %cst_26 = arith.constant dense<0.000000e+00> : vector<2x768xf32>
    %124 = tpu.matmul %123, %4, %cst_26 {dimension_numbers = #tpu.dot_dimension_numbers<[1], [0], [0], [1], [0, 0, 1, 1], [], []>} : vector<2x128xf32>, vector<128x768xf32>, vector<2x768xf32> -> vector<2x768xf32>
    %125 = vector.broadcast %5 : vector<1x768xf32> to vector<2x768xf32>
    %126 = arith.addf %124, %125 : vector<2x768xf32>
    %127 = vector.extract_strided_slice %126 {offsets = [0, 0], sizes = [2, 384], strides = [1, 1]} : vector<2x768xf32> to vector<2x384xf32>
    %128 = vector.extract_strided_slice %126 {offsets = [0, 384], sizes = [2, 384], strides = [1, 1]} : vector<2x768xf32> to vector<2x384xf32>
    %129 = vector.extract_strided_slice %14 {offsets = [0, 3, 0], sizes = [2, 1, 384], strides = [1, 1, 1]} : vector<2x8x384xf32> to vector<2x1x384xf32>
    %130 = vector.shape_cast %129 : vector<2x1x384xf32> to vector<2x384xf32>
    %131 = vector.extract_strided_slice %17 {offsets = [0, 3, 0], sizes = [2, 1, 1], strides = [1, 1, 1]} : vector<2x8x1xf32> to vector<2x1x1xf32>
    %132 = vector.shape_cast %131 : vector<2x1x1xf32> to vector<2x1xf32>
    %133 = vector.broadcast %132 : vector<2x1xf32> to vector<2x384xf32>
    %134 = arith.mulf %133, %128 : vector<2x384xf32>
    %135 = arith.addf %130, %134 : vector<2x384xf32>
    %136 = arith.addf %135, %127 : vector<2x384xf32>
    %137 = vector.extract_strided_slice %136 {offsets = [0, 0], sizes = [2, 128], strides = [1, 1]} : vector<2x384xf32> to vector<2x128xf32>
    %138 = arith.negf %137 : vector<2x128xf32>
    %139 = math.exp %138 : vector<2x128xf32>
    %cst_27 = arith.constant 1.000000e+00 : f32
    %140 = vector.broadcast %cst_27 : f32 to vector<2x128xf32>
    %141 = arith.addf %140, %139 : vector<2x128xf32>
    %142 = arith.divf %140, %141 : vector<2x128xf32>
    %143 = vector.extract_strided_slice %136 {offsets = [0, 128], sizes = [2, 128], strides = [1, 1]} : vector<2x384xf32> to vector<2x128xf32>
    %144 = arith.negf %143 : vector<2x128xf32>
    %145 = math.exp %144 : vector<2x128xf32>
    %cst_28 = arith.constant 1.000000e+00 : f32
    %146 = vector.broadcast %cst_28 : f32 to vector<2x128xf32>
    %147 = arith.addf %146, %145 : vector<2x128xf32>
    %148 = arith.divf %146, %147 : vector<2x128xf32>
    %149 = vector.extract_strided_slice %135 {offsets = [0, 256], sizes = [2, 128], strides = [1, 1]} : vector<2x384xf32> to vector<2x128xf32>
    %150 = vector.extract_strided_slice %127 {offsets = [0, 256], sizes = [2, 128], strides = [1, 1]} : vector<2x384xf32> to vector<2x128xf32>
    %151 = arith.mulf %142, %150 : vector<2x128xf32>
    %152 = arith.addf %149, %151 : vector<2x128xf32>
    %153 = math.tanh %152 : vector<2x128xf32>
    %cst_29 = arith.constant 1.000000e+00 : f32
    %154 = vector.broadcast %cst_29 : f32 to vector<2x128xf32>
    %155 = arith.subf %154, %148 : vector<2x128xf32>
    %156 = arith.mulf %155, %153 : vector<2x128xf32>
    %157 = arith.mulf %148, %123 : vector<2x128xf32>
    %158 = arith.addf %156, %157 : vector<2x128xf32>
    %cst_30 = arith.constant dense<0.000000e+00> : vector<2x768xf32>
    %159 = tpu.matmul %158, %4, %cst_30 {dimension_numbers = #tpu.dot_dimension_numbers<[1], [0], [0], [1], [0, 0, 1, 1], [], []>} : vector<2x128xf32>, vector<128x768xf32>, vector<2x768xf32> -> vector<2x768xf32>
    %160 = vector.broadcast %5 : vector<1x768xf32> to vector<2x768xf32>
    %161 = arith.addf %159, %160 : vector<2x768xf32>
    %162 = vector.extract_strided_slice %161 {offsets = [0, 0], sizes = [2, 384], strides = [1, 1]} : vector<2x768xf32> to vector<2x384xf32>
    %163 = vector.extract_strided_slice %161 {offsets = [0, 384], sizes = [2, 384], strides = [1, 1]} : vector<2x768xf32> to vector<2x384xf32>
    %164 = vector.extract_strided_slice %14 {offsets = [0, 4, 0], sizes = [2, 1, 384], strides = [1, 1, 1]} : vector<2x8x384xf32> to vector<2x1x384xf32>
    %165 = vector.shape_cast %164 : vector<2x1x384xf32> to vector<2x384xf32>
    %166 = vector.extract_strided_slice %17 {offsets = [0, 4, 0], sizes = [2, 1, 1], strides = [1, 1, 1]} : vector<2x8x1xf32> to vector<2x1x1xf32>
    %167 = vector.shape_cast %166 : vector<2x1x1xf32> to vector<2x1xf32>
    %168 = vector.broadcast %167 : vector<2x1xf32> to vector<2x384xf32>
    %169 = arith.mulf %168, %163 : vector<2x384xf32>
    %170 = arith.addf %165, %169 : vector<2x384xf32>
    %171 = arith.addf %170, %162 : vector<2x384xf32>
    %172 = vector.extract_strided_slice %171 {offsets = [0, 0], sizes = [2, 128], strides = [1, 1]} : vector<2x384xf32> to vector<2x128xf32>
    %173 = arith.negf %172 : vector<2x128xf32>
    %174 = math.exp %173 : vector<2x128xf32>
    %cst_31 = arith.constant 1.000000e+00 : f32
    %175 = vector.broadcast %cst_31 : f32 to vector<2x128xf32>
    %176 = arith.addf %175, %174 : vector<2x128xf32>
    %177 = arith.divf %175, %176 : vector<2x128xf32>
    %178 = vector.extract_strided_slice %171 {offsets = [0, 128], sizes = [2, 128], strides = [1, 1]} : vector<2x384xf32> to vector<2x128xf32>
    %179 = arith.negf %178 : vector<2x128xf32>
    %180 = math.exp %179 : vector<2x128xf32>
    %cst_32 = arith.constant 1.000000e+00 : f32
    %181 = vector.broadcast %cst_32 : f32 to vector<2x128xf32>
    %182 = arith.addf %181, %180 : vector<2x128xf32>
    %183 = arith.divf %181, %182 : vector<2x128xf32>
    %184 = vector.extract_strided_slice %170 {offsets = [0, 256], sizes = [2, 128], strides = [1, 1]} : vector<2x384xf32> to vector<2x128xf32>
    %185 = vector.extract_strided_slice %162 {offsets = [0, 256], sizes = [2, 128], strides = [1, 1]} : vector<2x384xf32> to vector<2x128xf32>
    %186 = arith.mulf %177, %185 : vector<2x128xf32>
    %187 = arith.addf %184, %186 : vector<2x128xf32>
    %188 = math.tanh %187 : vector<2x128xf32>
    %cst_33 = arith.constant 1.000000e+00 : f32
    %189 = vector.broadcast %cst_33 : f32 to vector<2x128xf32>
    %190 = arith.subf %189, %183 : vector<2x128xf32>
    %191 = arith.mulf %190, %188 : vector<2x128xf32>
    %192 = arith.mulf %183, %158 : vector<2x128xf32>
    %193 = arith.addf %191, %192 : vector<2x128xf32>
    %cst_34 = arith.constant dense<0.000000e+00> : vector<2x768xf32>
    %194 = tpu.matmul %193, %4, %cst_34 {dimension_numbers = #tpu.dot_dimension_numbers<[1], [0], [0], [1], [0, 0, 1, 1], [], []>} : vector<2x128xf32>, vector<128x768xf32>, vector<2x768xf32> -> vector<2x768xf32>
    %195 = vector.broadcast %5 : vector<1x768xf32> to vector<2x768xf32>
    %196 = arith.addf %194, %195 : vector<2x768xf32>
    %197 = vector.extract_strided_slice %196 {offsets = [0, 0], sizes = [2, 384], strides = [1, 1]} : vector<2x768xf32> to vector<2x384xf32>
    %198 = vector.extract_strided_slice %196 {offsets = [0, 384], sizes = [2, 384], strides = [1, 1]} : vector<2x768xf32> to vector<2x384xf32>
    %199 = vector.extract_strided_slice %14 {offsets = [0, 5, 0], sizes = [2, 1, 384], strides = [1, 1, 1]} : vector<2x8x384xf32> to vector<2x1x384xf32>
    %200 = vector.shape_cast %199 : vector<2x1x384xf32> to vector<2x384xf32>
    %201 = vector.extract_strided_slice %17 {offsets = [0, 5, 0], sizes = [2, 1, 1], strides = [1, 1, 1]} : vector<2x8x1xf32> to vector<2x1x1xf32>
    %202 = vector.shape_cast %201 : vector<2x1x1xf32> to vector<2x1xf32>
    %203 = vector.broadcast %202 : vector<2x1xf32> to vector<2x384xf32>
    %204 = arith.mulf %203, %198 : vector<2x384xf32>
    %205 = arith.addf %200, %204 : vector<2x384xf32>
    %206 = arith.addf %205, %197 : vector<2x384xf32>
    %207 = vector.extract_strided_slice %206 {offsets = [0, 0], sizes = [2, 128], strides = [1, 1]} : vector<2x384xf32> to vector<2x128xf32>
    %208 = arith.negf %207 : vector<2x128xf32>
    %209 = math.exp %208 : vector<2x128xf32>
    %cst_35 = arith.constant 1.000000e+00 : f32
    %210 = vector.broadcast %cst_35 : f32 to vector<2x128xf32>
    %211 = arith.addf %210, %209 : vector<2x128xf32>
    %212 = arith.divf %210, %211 : vector<2x128xf32>
    %213 = vector.extract_strided_slice %206 {offsets = [0, 128], sizes = [2, 128], strides = [1, 1]} : vector<2x384xf32> to vector<2x128xf32>
    %214 = arith.negf %213 : vector<2x128xf32>
    %215 = math.exp %214 : vector<2x128xf32>
    %cst_36 = arith.constant 1.000000e+00 : f32
    %216 = vector.broadcast %cst_36 : f32 to vector<2x128xf32>
    %217 = arith.addf %216, %215 : vector<2x128xf32>
    %218 = arith.divf %216, %217 : vector<2x128xf32>
    %219 = vector.extract_strided_slice %205 {offsets = [0, 256], sizes = [2, 128], strides = [1, 1]} : vector<2x384xf32> to vector<2x128xf32>
    %220 = vector.extract_strided_slice %197 {offsets = [0, 256], sizes = [2, 128], strides = [1, 1]} : vector<2x384xf32> to vector<2x128xf32>
    %221 = arith.mulf %212, %220 : vector<2x128xf32>
    %222 = arith.addf %219, %221 : vector<2x128xf32>
    %223 = math.tanh %222 : vector<2x128xf32>
    %cst_37 = arith.constant 1.000000e+00 : f32
    %224 = vector.broadcast %cst_37 : f32 to vector<2x128xf32>
    %225 = arith.subf %224, %218 : vector<2x128xf32>
    %226 = arith.mulf %225, %223 : vector<2x128xf32>
    %227 = arith.mulf %218, %193 : vector<2x128xf32>
    %228 = arith.addf %226, %227 : vector<2x128xf32>
    %cst_38 = arith.constant dense<0.000000e+00> : vector<2x768xf32>
    %229 = tpu.matmul %228, %4, %cst_38 {dimension_numbers = #tpu.dot_dimension_numbers<[1], [0], [0], [1], [0, 0, 1, 1], [], []>} : vector<2x128xf32>, vector<128x768xf32>, vector<2x768xf32> -> vector<2x768xf32>
    %230 = vector.broadcast %5 : vector<1x768xf32> to vector<2x768xf32>
    %231 = arith.addf %229, %230 : vector<2x768xf32>
    %232 = vector.extract_strided_slice %231 {offsets = [0, 0], sizes = [2, 384], strides = [1, 1]} : vector<2x768xf32> to vector<2x384xf32>
    %233 = vector.extract_strided_slice %231 {offsets = [0, 384], sizes = [2, 384], strides = [1, 1]} : vector<2x768xf32> to vector<2x384xf32>
    %234 = vector.extract_strided_slice %14 {offsets = [0, 6, 0], sizes = [2, 1, 384], strides = [1, 1, 1]} : vector<2x8x384xf32> to vector<2x1x384xf32>
    %235 = vector.shape_cast %234 : vector<2x1x384xf32> to vector<2x384xf32>
    %236 = vector.extract_strided_slice %17 {offsets = [0, 6, 0], sizes = [2, 1, 1], strides = [1, 1, 1]} : vector<2x8x1xf32> to vector<2x1x1xf32>
    %237 = vector.shape_cast %236 : vector<2x1x1xf32> to vector<2x1xf32>
    %238 = vector.broadcast %237 : vector<2x1xf32> to vector<2x384xf32>
    %239 = arith.mulf %238, %233 : vector<2x384xf32>
    %240 = arith.addf %235, %239 : vector<2x384xf32>
    %241 = arith.addf %240, %232 : vector<2x384xf32>
    %242 = vector.extract_strided_slice %241 {offsets = [0, 0], sizes = [2, 128], strides = [1, 1]} : vector<2x384xf32> to vector<2x128xf32>
    %243 = arith.negf %242 : vector<2x128xf32>
    %244 = math.exp %243 : vector<2x128xf32>
    %cst_39 = arith.constant 1.000000e+00 : f32
    %245 = vector.broadcast %cst_39 : f32 to vector<2x128xf32>
    %246 = arith.addf %245, %244 : vector<2x128xf32>
    %247 = arith.divf %245, %246 : vector<2x128xf32>
    %248 = vector.extract_strided_slice %241 {offsets = [0, 128], sizes = [2, 128], strides = [1, 1]} : vector<2x384xf32> to vector<2x128xf32>
    %249 = arith.negf %248 : vector<2x128xf32>
    %250 = math.exp %249 : vector<2x128xf32>
    %cst_40 = arith.constant 1.000000e+00 : f32
    %251 = vector.broadcast %cst_40 : f32 to vector<2x128xf32>
    %252 = arith.addf %251, %250 : vector<2x128xf32>
    %253 = arith.divf %251, %252 : vector<2x128xf32>
    %254 = vector.extract_strided_slice %240 {offsets = [0, 256], sizes = [2, 128], strides = [1, 1]} : vector<2x384xf32> to vector<2x128xf32>
    %255 = vector.extract_strided_slice %232 {offsets = [0, 256], sizes = [2, 128], strides = [1, 1]} : vector<2x384xf32> to vector<2x128xf32>
    %256 = arith.mulf %247, %255 : vector<2x128xf32>
    %257 = arith.addf %254, %256 : vector<2x128xf32>
    %258 = math.tanh %257 : vector<2x128xf32>
    %cst_41 = arith.constant 1.000000e+00 : f32
    %259 = vector.broadcast %cst_41 : f32 to vector<2x128xf32>
    %260 = arith.subf %259, %253 : vector<2x128xf32>
    %261 = arith.mulf %260, %258 : vector<2x128xf32>
    %262 = arith.mulf %253, %228 : vector<2x128xf32>
    %263 = arith.addf %261, %262 : vector<2x128xf32>
    %264 = vector.shape_cast %18 : vector<2x128xf32> to vector<2x1x128xf32>
    %265 = vector.shape_cast %53 : vector<2x128xf32> to vector<2x1x128xf32>
    %266 = vector.shape_cast %88 : vector<2x128xf32> to vector<2x1x128xf32>
    %267 = vector.shape_cast %123 : vector<2x128xf32> to vector<2x1x128xf32>
    %268 = vector.shape_cast %158 : vector<2x128xf32> to vector<2x1x128xf32>
    %269 = vector.shape_cast %193 : vector<2x128xf32> to vector<2x1x128xf32>
    %270 = vector.shape_cast %228 : vector<2x128xf32> to vector<2x1x128xf32>
    %271 = vector.shape_cast %263 : vector<2x128xf32> to vector<2x1x128xf32>
    %272 = tpu.concatenate %264, %265, %266, %267, %268, %269, %270, %271 in 1 : vector<2x1x128xf32>, vector<2x1x128xf32>, vector<2x1x128xf32>, vector<2x1x128xf32>, vector<2x1x128xf32>, vector<2x1x128xf32>, vector<2x1x128xf32>, vector<2x1x128xf32> -> vector<2x8x128xf32>
    %c0_42 = arith.constant 0 : index
    %c0_43 = arith.constant 0 : index
    %c0_44 = arith.constant 0 : index
    %273 = vector.load %arg9[%c0_42, %c0_43, %c0_44] : memref<2x8x128xf32, #tpu.memory_space<vmem>>, vector<2x8x128xf32>
    tpu.vector_store %arg9[%c0_42, %c0_43, %c0_44], %272 {strides = array<i32>} : memref<2x8x128xf32, #tpu.memory_space<vmem>>, vector<2x8x128xf32>,
    %c0_45 = arith.constant 0 : index
    %c0_46 = arith.constant 0 : index
    %274 = vector.load %arg6[%c0_45, %c0_46] : memref<128x128xf32, #tpu.memory_space<vmem>>, vector<128x128xf32>
    %c0_47 = arith.constant 0 : index
    %c0_48 = arith.constant 0 : index
    %275 = vector.load %arg7[%c0_47, %c0_48] : memref<1x128xf32, #tpu.memory_space<vmem>>, vector<1x128xf32>
    %276 = vector.shape_cast %272 : vector<2x8x128xf32> to vector<16x128xf32>
    %cst_49 = arith.constant dense<0.000000e+00> : vector<16x128xf32>
    %277 = tpu.matmul %276, %274, %cst_49 {dimension_numbers = #tpu.dot_dimension_numbers<[1], [0], [0], [1], [0, 0, 1, 1], [], []>} : vector<16x128xf32>, vector<128x128xf32>, vector<16x128xf32> -> vector<16x128xf32>
    %278 = vector.broadcast %275 : vector<1x128xf32> to vector<16x128xf32>
    %279 = arith.addf %277, %278 : vector<16x128xf32>
    %280 = vector.shape_cast %279 : vector<16x128xf32> to vector<2x8x128xf32>
    %281 = tpu.iota {dimensions = array<i32: 1>} : vector<2x8x128xi32>
    %c0_i32 = arith.constant 0 : i32
    %282 = vector.broadcast %c0_i32 : i32 to vector<2x8x128xi32>
    %283 = arith.cmpi eq, %281, %282 : vector<2x8x128xi32>
    %284 = arith.select %283, %0, %280 : vector<2x8x128xi1>, vector<2x8x128xf32>
    %c0_50 = arith.constant 0 : index
    %c0_51 = arith.constant 0 : index
    %c0_52 = arith.constant 0 : index
    %285 = vector.load %arg8[%c0_50, %c0_51, %c0_52] : memref<2x8x128xf32, #tpu.memory_space<vmem>>, vector<2x8x128xf32>
    tpu.vector_store %arg8[%c0_50, %c0_51, %c0_52], %284 {strides = array<i32>} : memref<2x8x128xf32, #tpu.memory_space<vmem>>, vector<2x8x128xf32>,
    return
  }
}

</mosaic_0001>

<llo_original>
// kernel: tpu_custom_call.1
$region0: #{tpu_custom_call.1}
  #allocation0 [shape = 'u32[]', space=smem, size = 0x4, offset = 0x4, fixed_abs, tag = 'smem constant byte address 0x4 - core index']
  #allocation1 [shape = 'u32[72,128]{1,0:T(1,128)}', space=vmem, size = 0x9000, scoped, tag = 'internal scratch']
  %s0 = inlined_call_operand.hbm [shape: f32[2,8,128], index: 0, kind: input, shape index: {}]
  %s1 = inlined_call_operand.hbm [shape: f32[2,8], index: 1, kind: input, shape index: {}]
  %s2 = inlined_call_operand.hbm [shape: f32[128,384], index: 2, kind: input, shape index: {}]
  %s3 = inlined_call_operand.hbm [shape: f32[1,384], index: 3, kind: input, shape index: {}]
  %s4 = inlined_call_operand.hbm [shape: f32[128,768], index: 4, kind: input, shape index: {}]
  %s5 = inlined_call_operand.hbm [shape: f32[1,768], index: 5, kind: input, shape index: {}]
  %s6 = inlined_call_operand.hbm [shape: f32[128,128], index: 6, kind: input, shape index: {}]
  %s7 = inlined_call_operand.vmem [shape: f32[1,128], index: 7, kind: input, shape index: {}]
  %s8 = inlined_call_operand.hbm [shape: f32[2,8,128], index: 8, kind: output, shape index: {0}]
  %s9 = inlined_call_operand.hbm [shape: f32[2,8,128], index: 9, kind: output, shape index: {1}]
  %10 = xla_tuple %s8, %s9
  %s11 = sld [smem:[#allocation0]]
  $region78: #{tpu_custom_call.1} parent=0
    _
  %s13 = ssub.s32 1, %s11
  %s14 = scalar_select 0, %s13, %s11
  $region1: #{tpu_custom_call.1} parent=0
    #allocation2 [shape = 'u8[8192]{0}', space=vmem, size = 0x2000, scoped, tag = 'input window, operand 0, single buffered']
    #allocation3 [shape = 's32[1]{0}', space=sflag, size = 0x4, scoped, tag = 'scoped memory for tpu_custom_call.1']
    #allocation4 [shape = 's32[1]{0}', space=sflag, size = 0x4, scoped, tag = 'scoped memory for tpu_custom_call.1']
    #allocation5 [shape = 'u8[1024]{0}', space=vmem, size = 0x400, scoped, tag = 'input window, operand 1, single buffered']
    #allocation6 [shape = 's32[1]{0}', space=sflag, size = 0x4, scoped, tag = 'scoped memory for tpu_custom_call.1']
    #allocation7 [shape = 'u8[196608]{0}', space=vmem, size = 0x30000, scoped, tag = 'input window, operand 2, single buffered']
    #allocation8 [shape = 'u8[1536]{0}', space=vmem, size = 0x800, scoped, tag = 'input window, operand 3, single buffered']
    #allocation9 [shape = 's32[1]{0}', space=sflag, size = 0x4, scoped, tag = 'scoped memory for tpu_custom_call.1']
    #allocation10 [shape = 'u8[393216]{0}', space=vmem, size = 0x60000, scoped, tag = 'input window, operand 4, single buffered']
    #allocation11 [shape = 'u8[3072]{0}', space=vmem, size = 0xc00, scoped, tag = 'input window, operand 5, single buffered']
    #allocation12 [shape = 's32[1]{0}', space=sflag, size = 0x4, scoped, tag = 'scoped memory for tpu_custom_call.1']
    #allocation13 [shape = 'u8[65536]{0}', space=vmem, size = 0x10000, scoped, tag = 'input window, operand 6, single buffered']
    #allocation14 [shape = 'u8[8192]{0}', space=vmem, size = 0x2000, scoped, tag = 'output window, operand 0, single buffered']
    #allocation15 [shape = 'u8[8192]{0}', space=vmem, size = 0x2000, scoped, tag = 'output window, operand 1, single buffered']
    #allocation16 [shape = 's32[1]{0}', space=sflag, size = 0x4, scoped, tag = 'scoped memory for tpu_custom_call.1']
    %15 = vsyncpa [#allocation3], 0
    %16 = vsyncpa [#allocation6], 0
    %17 = vsyncpa [#allocation9], 0
    %18 = vsyncpa [#allocation12], 0
    %19 = vsyncpa [#allocation4], 0
    %20 = vsyncpa [#allocation16], 0
    // Predicated region
    $region2: #{tpu_custom_call.1} parent=1 // pred_check
      _
    $region3: #{tpu_custom_call.1} parent=1 // pred_check_branch
      %22 = sbr.rel (0) target = $region5
    $region4: #{tpu_custom_call.1} parent=1 // pred_region
      %24 = vsyncadd [#allocation3], 0
      %s25 = sshll.u32 %s0, 4
      %s26 = int_to_ptr.hbm [resolvable:$true] %s25
      %s27 = sshll.u32 [#allocation2], 4
      %s28 = int_to_ptr.vmem [resolvable:$true] %s27
      %33 = dma.hbm_to_vmem [thread:$0]  %s26, 256, %s28, [#allocation3], 128, 128, 8
    $region5: #{tpu_custom_call.1} parent=1 // pred_fallthru
      _
    // Predicated region
    $region6: #{tpu_custom_call.1} parent=1 // pred_check
      _
    $region7: #{tpu_custom_call.1} parent=1 // pred_check_branch
      %35 = sbr.rel (0) target = $region9
    $region8: #{tpu_custom_call.1} parent=1 // pred_region
      %37 = vsyncadd [#allocation6], 0
      %s39 = sshll.u32 %s1, 4
      %s40 = int_to_ptr.hbm [resolvable:$true] %s39
      %s41 = sshll.u32 [#allocation5], 4
      %s42 = int_to_ptr.vmem [resolvable:$true] %s41
      %44 = dma.hbm_to_vmem [thread:$0]  %s40, 32, %s42, [#allocation6]
    $region9: #{tpu_custom_call.1} parent=1 // pred_fallthru
      _
    // Predicated region
    $region10: #{tpu_custom_call.1} parent=1 // pred_check
      _
    $region11: #{tpu_custom_call.1} parent=1 // pred_check_branch
      %46 = sbr.rel (0) target = $region13
    $region12: #{tpu_custom_call.1} parent=1 // pred_region
      %48 = vsyncadd [#allocation6], 0
      %s49 = sshll.u32 %s2, 4
      %s50 = int_to_ptr.hbm [resolvable:$true] %s49
      %s51 = sshll.u32 [#allocation7], 4
      %s52 = int_to_ptr.vmem [resolvable:$true] %s51
      %57 = dma.hbm_to_vmem [thread:$0]  %s50, 6144, %s52, [#allocation6], 384, 384, 24
    $region13: #{tpu_custom_call.1} parent=1 // pred_fallthru
      _
    // Predicated region
    $region14: #{tpu_custom_call.1} parent=1 // pred_check
      _
    $region15: #{tpu_custom_call.1} parent=1 // pred_check_branch
      %59 = sbr.rel (0) target = $region17
    $region16: #{tpu_custom_call.1} parent=1 // pred_region
      %61 = vsyncadd [#allocation9], 0
      %s63 = sshll.u32 %s3, 4
      %s64 = int_to_ptr.hbm [resolvable:$true] %s63
      %s65 = sshll.u32 [#allocation8], 4
      %s66 = int_to_ptr.vmem [resolvable:$true] %s65
      %68 = dma.hbm_to_vmem [thread:$0]  %s64, 48, %s66, [#allocation9]
    $region17: #{tpu_custom_call.1} parent=1 // pred_fallthru
      _
    // Predicated region
    $region18: #{tpu_custom_call.1} parent=1 // pred_check
      _
    $region19: #{tpu_custom_call.1} parent=1 // pred_check_branch
      %70 = sbr.rel (0) target = $region21
    $region20: #{tpu_custom_call.1} parent=1 // pred_region
      %72 = vsyncadd [#allocation9], 0
      %s73 = sshll.u32 %s4, 4
      %s74 = int_to_ptr.hbm [resolvable:$true] %s73
      %s75 = sshll.u32 [#allocation10], 4
      %s76 = int_to_ptr.vmem [resolvable:$true] %s75
      %81 = dma.hbm_to_vmem [thread:$0]  %s74, 12288, %s76, [#allocation9], 768, 768, 48
    $region21: #{tpu_custom_call.1} parent=1 // pred_fallthru
      _
    // Predicated region
    $region22: #{tpu_custom_call.1} parent=1 // pred_check
      _
    $region23: #{tpu_custom_call.1} parent=1 // pred_check_branch
      %83 = sbr.rel (0) target = $region25
    $region24: #{tpu_custom_call.1} parent=1 // pred_region
      %85 = vsyncadd [#allocation12], 0
      %s87 = sshll.u32 %s5, 4
      %s88 = int_to_ptr.hbm [resolvable:$true] %s87
      %s89 = sshll.u32 [#allocation11], 4
      %s90 = int_to_ptr.vmem [resolvable:$true] %s89
      %92 = dma.hbm_to_vmem [thread:$0]  %s88, 96, %s90, [#allocation12]
    $region25: #{tpu_custom_call.1} parent=1 // pred_fallthru
      _
    // Predicated region
    $region26: #{tpu_custom_call.1} parent=1 // pred_check
      _
    $region27: #{tpu_custom_call.1} parent=1 // pred_check_branch
      %94 = sbr.rel (0) target = $region29
    $region28: #{tpu_custom_call.1} parent=1 // pred_region
      %96 = vsyncadd [#allocation12], 0
      %s97 = sshll.u32 %s6, 4
      %s98 = int_to_ptr.hbm [resolvable:$true] %s97
      %s99 = sshll.u32 [#allocation13], 4
      %s100 = int_to_ptr.vmem [resolvable:$true] %s99
      %105 = dma.hbm_to_vmem [thread:$0]  %s98, 2048, %s100, [#allocation12], 128, 128, 8
    $region29: #{tpu_custom_call.1} parent=1 // pred_fallthru
      _
    // Predicated region
    $region30: #{tpu_custom_call.1} parent=1 // pred_check
      _
    $region31: #{tpu_custom_call.1} parent=1 // pred_check_branch
      %107 = sbr.rel (0) target = $region33
    $region32: #{tpu_custom_call.1} parent=1 // pred_region
      _
    $region33: #{tpu_custom_call.1} parent=1 // pred_fallthru
      _
    // Predicated region
    $region34: #{tpu_custom_call.1} parent=1 // pred_check
      _
    $region35: #{tpu_custom_call.1} parent=1 // pred_check_branch
      %109 = sbr.rel (0) target = $region37
    $region36: #{tpu_custom_call.1} parent=1 // pred_region
      %111 = dma.done [#allocation3], 256
    $region37: #{tpu_custom_call.1} parent=1 // pred_fallthru
      _
    // Predicated region
    $region38: #{tpu_custom_call.1} parent=1 // pred_check
      _
    $region39: #{tpu_custom_call.1} parent=1 // pred_check_branch
      %113 = sbr.rel (0) target = $region41
    $region40: #{tpu_custom_call.1} parent=1 // pred_region
      %115 = dma.done [#allocation6], 32
    $region41: #{tpu_custom_call.1} parent=1 // pred_fallthru
      _
    // Predicated region
    $region42: #{tpu_custom_call.1} parent=1 // pred_check
      _
    $region43: #{tpu_custom_call.1} parent=1 // pred_check_branch
      %117 = sbr.rel (0) target = $region45
    $region44: #{tpu_custom_call.1} parent=1 // pred_region
      %119 = dma.done [#allocation6], 6144
    $region45: #{tpu_custom_call.1} parent=1 // pred_fallthru
      _
    // Predicated region
    $region46: #{tpu_custom_call.1} parent=1 // pred_check
      _
    $region47: #{tpu_custom_call.1} parent=1 // pred_check_branch
      %121 = sbr.rel (0) target = $region49
    $region48: #{tpu_custom_call.1} parent=1 // pred_region
      %123 = dma.done [#allocation9], 48
    $region49: #{tpu_custom_call.1} parent=1 // pred_fallthru
      _
    // Predicated region
    $region50: #{tpu_custom_call.1} parent=1 // pred_check
      _
    $region51: #{tpu_custom_call.1} parent=1 // pred_check_branch
      %125 = sbr.rel (0) target = $region53
    $region52: #{tpu_custom_call.1} parent=1 // pred_region
      %127 = dma.done [#allocation9], 12288
    $region53: #{tpu_custom_call.1} parent=1 // pred_fallthru
      _
    // Predicated region
    $region54: #{tpu_custom_call.1} parent=1 // pred_check
      _
    $region55: #{tpu_custom_call.1} parent=1 // pred_check_branch
      %129 = sbr.rel (0) target = $region57
    $region56: #{tpu_custom_call.1} parent=1 // pred_region
      %131 = dma.done [#allocation12], 96
    $region57: #{tpu_custom_call.1} parent=1 // pred_fallthru
      _
    // Predicated region
    $region58: #{tpu_custom_call.1} parent=1 // pred_check
      _
    $region59: #{tpu_custom_call.1} parent=1 // pred_check_branch
      %133 = sbr.rel (0) target = $region61
    $region60: #{tpu_custom_call.1} parent=1 // pred_region
      %135 = dma.done [#allocation12], 2048
    $region61: #{tpu_custom_call.1} parent=1 // pred_fallthru
      _
    %v136 = vld [vmem:[#allocation2] sm:$0xff]
    %v137 = vld [vmem:[#allocation2 + $0x8] sm:$0xff]
    %v138 = vld [vmem:[#allocation5] sm:$0x3]
    %v139 = vld [vmem:[#allocation7] sm:$0xff]
    %v140 = vld [vmem:[#allocation7 + $0x8] sm:$0xff]
    %v141 = vld [vmem:[#allocation7 + $0x10] sm:$0xff]
    %v142 = vld [vmem:[#allocation7 + $0x18] sm:$0xff]
    %v143 = vld [vmem:[#allocation7 + $0x20] sm:$0xff]
    %v144 = vld [vmem:[#allocation7 + $0x28] sm:$0xff]
    %v145 = vld [vmem:[#allocation7 + $0x30] sm:$0xff]
    %v146 = vld [vmem:[#allocation7 + $0x38] sm:$0xff]
    %v147 = vld [vmem:[#allocation7 + $0x40] sm:$0xff]
    %v148 = vld [vmem:[#allocation7 + $0x48] sm:$0xff]
    %v149 = vld [vmem:[#allocation7 + $0x50] sm:$0xff]
    %v150 = vld [vmem:[#allocation7 + $0x58] sm:$0xff]
    %v151 = vld [vmem:[#allocation7 + $0x60] sm:$0xff]
    %v152 = vld [vmem:[#allocation7 + $0x68] sm:$0xff]
    %v153 = vld [vmem:[#allocation7 + $0x70] sm:$0xff]
    %v154 = vld [vmem:[#allocation7 + $0x78] sm:$0xff]
    %v155 = vld [vmem:[#allocation7 + $0x80] sm:$0xff]
    %v156 = vld [vmem:[#allocation7 + $0x88] sm:$0xff]
    %v157 = vld [vmem:[#allocation7 + $0x90] sm:$0xff]
    %v158 = vld [vmem:[#allocation7 + $0x98] sm:$0xff]
    %v159 = vld [vmem:[#allocation7 + $0xa0] sm:$0xff]
    %v160 = vld [vmem:[#allocation7 + $0xa8] sm:$0xff]
    %v161 = vld [vmem:[#allocation7 + $0xb0] sm:$0xff]
    %v162 = vld [vmem:[#allocation7 + $0xb8] sm:$0xff]
    %v163 = vld [vmem:[#allocation7 + $0xc0] sm:$0xff]
    %v164 = vld [vmem:[#allocation7 + $0xc8] sm:$0xff]
    %v165 = vld [vmem:[#allocation7 + $0xd0] sm:$0xff]
    %v166 = vld [vmem:[#allocation7 + $0xd8] sm:$0xff]
    %v167 = vld [vmem:[#allocation7 + $0xe0] sm:$0xff]
    %v168 = vld [vmem:[#allocation7 + $0xe8] sm:$0xff]
    %v169 = vld [vmem:[#allocation7 + $0xf0] sm:$0xff]
    %v170 = vld [vmem:[#allocation7 + $0xf8] sm:$0xff]
    %v171 = vld [vmem:[#allocation7 + $0x100] sm:$0xff]
    %v172 = vld [vmem:[#allocation7 + $0x108] sm:$0xff]
    %v173 = vld [vmem:[#allocation7 + $0x110] sm:$0xff]
    %v174 = vld [vmem:[#allocation7 + $0x118] sm:$0xff]
    %v175 = vld [vmem:[#allocation7 + $0x120] sm:$0xff]
    %v176 = vld [vmem:[#allocation7 + $0x128] sm:$0xff]
    %v177 = vld [vmem:[#allocation7 + $0x130] sm:$0xff]
    %v178 = vld [vmem:[#allocation7 + $0x138] sm:$0xff]
    %v179 = vld [vmem:[#allocation7 + $0x140] sm:$0xff]
    %v180 = vld [vmem:[#allocation7 + $0x148] sm:$0xff]
    %v181 = vld [vmem:[#allocation7 + $0x150] sm:$0xff]
    %v182 = vld [vmem:[#allocation7 + $0x158] sm:$0xff]
    %v183 = vld [vmem:[#allocation7 + $0x160] sm:$0xff]
    %v184 = vld [vmem:[#allocation7 + $0x168] sm:$0xff]
    %v185 = vld [vmem:[#allocation7 + $0x170] sm:$0xff]
    %v186 = vld [vmem:[#allocation7 + $0x178] sm:$0xff]
    %v187 = vld [vmem:[#allocation8] sm:$0x7]
    %v188 = vld [vmem:[#allocation10] sm:$0xff]
    %v189 = vld [vmem:[#allocation10 + $0x8] sm:$0xff]
    %v190 = vld [vmem:[#allocation10 + $0x10] sm:$0xff]
    %v191 = vld [vmem:[#allocation10 + $0x18] sm:$0xff]
    %v192 = vld [vmem:[#allocation10 + $0x20] sm:$0xff]
    %v193 = vld [vmem:[#allocation10 + $0x28] sm:$0xff]
    %v194 = vld [vmem:[#allocation10 + $0x30] sm:$0xff]
    %v195 = vld [vmem:[#allocation10 + $0x38] sm:$0xff]
    %v196 = vld [vmem:[#allocation10 + $0x40] sm:$0xff]
    %v197 = vld [vmem:[#allocation10 + $0x48] sm:$0xff]
    %v198 = vld [vmem:[#allocation10 + $0x50] sm:$0xff]
    %v199 = vld [vmem:[#allocation10 + $0x58] sm:$0xff]
    %v200 = vld [vmem:[#allocation10 + $0x60] sm:$0xff]
    %v201 = vld [vmem:[#allocation10 + $0x68] sm:$0xff]
    %v202 = vld [vmem:[#allocation10 + $0x70] sm:$0xff]
    %v203 = vld [vmem:[#allocation10 + $0x78] sm:$0xff]
    %v204 = vld [vmem:[#allocation10 + $0x80] sm:$0xff]
    %v205 = vld [vmem:[#allocation10 + $0x88] sm:$0xff]
    %v206 = vld [vmem:[#allocation10 + $0x90] sm:$0xff]
    %v207 = vld [vmem:[#allocation10 + $0x98] sm:$0xff]
    %v208 = vld [vmem:[#allocation10 + $0xa0] sm:$0xff]
    %v209 = vld [vmem:[#allocation10 + $0xa8] sm:$0xff]
    %v210 = vld [vmem:[#allocation10 + $0xb0] sm:$0xff]
    %v211 = vld [vmem:[#allocation10 + $0xb8] sm:$0xff]
    %v212 = vld [vmem:[#allocation10 + $0xc0] sm:$0xff]
    %v213 = vld [vmem:[#allocation10 + $0xc8] sm:$0xff]
    %v214 = vld [vmem:[#allocation10 + $0xd0] sm:$0xff]
    %v215 = vld [vmem:[#allocation10 + $0xd8] sm:$0xff]
    %v216 = vld [vmem:[#allocation10 + $0xe0] sm:$0xff]
    %v217 = vld [vmem:[#allocation10 + $0xe8] sm:$0xff]
    %v218 = vld [vmem:[#allocation10 + $0xf0] sm:$0xff]
    %v219 = vld [vmem:[#allocation10 + $0xf8] sm:$0xff]
    %v220 = vld [vmem:[#allocation10 + $0x100] sm:$0xff]
    %v221 = vld [vmem:[#allocation10 + $0x108] sm:$0xff]
    %v222 = vld [vmem:[#allocation10 + $0x110] sm:$0xff]
    %v223 = vld [vmem:[#allocation10 + $0x118] sm:$0xff]
    %v224 = vld [vmem:[#allocation10 + $0x120] sm:$0xff]
    %v225 = vld [vmem:[#allocation10 + $0x128] sm:$0xff]
    %v226 = vld [vmem:[#allocation10 + $0x130] sm:$0xff]
    %v227 = vld [vmem:[#allocation10 + $0x138] sm:$0xff]
    %v228 = vld [vmem:[#allocation10 + $0x140] sm:$0xff]
    %v229 = vld [vmem:[#allocation10 + $0x148] sm:$0xff]
    %v230 = vld [vmem:[#allocation10 + $0x150] sm:$0xff]
    %v231 = vld [vmem:[#allocation10 + $0x158] sm:$0xff]
    %v232 = vld [vmem:[#allocation10 + $0x160] sm:$0xff]
    %v233 = vld [vmem:[#allocation10 + $0x168] sm:$0xff]
    %v234 = vld [vmem:[#allocation10 + $0x170] sm:$0xff]
    %v235 = vld [vmem:[#allocation10 + $0x178] sm:$0xff]
    %v236 = vld [vmem:[#allocation10 + $0x180] sm:$0xff]
    %v237 = vld [vmem:[#allocation10 + $0x188] sm:$0xff]
    %v238 = vld [vmem:[#allocation10 + $0x190] sm:$0xff]
    %v239 = vld [vmem:[#allocation10 + $0x198] sm:$0xff]
    %v240 = vld [vmem:[#allocation10 + $0x1a0] sm:$0xff]
    %v241 = vld [vmem:[#allocation10 + $0x1a8] sm:$0xff]
    %v242 = vld [vmem:[#allocation10 + $0x1b0] sm:$0xff]
    %v243 = vld [vmem:[#allocation10 + $0x1b8] sm:$0xff]
    %v244 = vld [vmem:[#allocation10 + $0x1c0] sm:$0xff]
    %v245 = vld [vmem:[#allocation10 + $0x1c8] sm:$0xff]
    %v246 = vld [vmem:[#allocation10 + $0x1d0] sm:$0xff]
    %v247 = vld [vmem:[#allocation10 + $0x1d8] sm:$0xff]
    %v248 = vld [vmem:[#allocation10 + $0x1e0] sm:$0xff]
    %v249 = vld [vmem:[#allocation10 + $0x1e8] sm:$0xff]
    %v250 = vld [vmem:[#allocation10 + $0x1f0] sm:$0xff]
    %v251 = vld [vmem:[#allocation10 + $0x1f8] sm:$0xff]
    %v252 = vld [vmem:[#allocation10 + $0x200] sm:$0xff]
    %v253 = vld [vmem:[#allocation10 + $0x208] sm:$0xff]
    %v254 = vld [vmem:[#allocation10 + $0x210] sm:$0xff]
    %v255 = vld [vmem:[#allocation10 + $0x218] sm:$0xff]
    %v256 = vld [vmem:[#allocation10 + $0x220] sm:$0xff]
    %v257 = vld [vmem:[#allocation10 + $0x228] sm:$0xff]
    %v258 = vld [vmem:[#allocation10 + $0x230] sm:$0xff]
    %v259 = vld [vmem:[#allocation10 + $0x238] sm:$0xff]
    %v260 = vld [vmem:[#allocation10 + $0x240] sm:$0xff]
    %v261 = vld [vmem:[#allocation10 + $0x248] sm:$0xff]
    %v262 = vld [vmem:[#allocation10 + $0x250] sm:$0xff]
    %v263 = vld [vmem:[#allocation10 + $0x258] sm:$0xff]
    %v264 = vld [vmem:[#allocation10 + $0x260] sm:$0xff]
    %v265 = vld [vmem:[#allocation10 + $0x268] sm:$0xff]
    %v266 = vld [vmem:[#allocation10 + $0x270] sm:$0xff]
    %v267 = vld [vmem:[#allocation10 + $0x278] sm:$0xff]
    %v268 = vld [vmem:[#allocation10 + $0x280] sm:$0xff]
    %v269 = vld [vmem:[#allocation10 + $0x288] sm:$0xff]
    %v270 = vld [vmem:[#allocation10 + $0x290] sm:$0xff]
    %v271 = vld [vmem:[#allocation10 + $0x298] sm:$0xff]
    %v272 = vld [vmem:[#allocation10 + $0x2a0] sm:$0xff]
    %v273 = vld [vmem:[#allocation10 + $0x2a8] sm:$0xff]
    %v274 = vld [vmem:[#allocation10 + $0x2b0] sm:$0xff]
    %v275 = vld [vmem:[#allocation10 + $0x2b8] sm:$0xff]
    %v276 = vld [vmem:[#allocation10 + $0x2c0] sm:$0xff]
    %v277 = vld [vmem:[#allocation10 + $0x2c8] sm:$0xff]
    %v278 = vld [vmem:[#allocation10 + $0x2d0] sm:$0xff]
    %v279 = vld [vmem:[#allocation10 + $0x2d8] sm:$0xff]
    %v280 = vld [vmem:[#allocation10 + $0x2e0] sm:$0xff]
    %v281 = vld [vmem:[#allocation10 + $0x2e8] sm:$0xff]
    %v282 = vld [vmem:[#allocation10 + $0x2f0] sm:$0xff]
    %v283 = vld [vmem:[#allocation10 + $0x2f8] sm:$0xff]
    %v284 = vld [vmem:[#allocation11] sm:$0x3f]
    %285 = vmatpush.msra.mxu0 %v184
    %286 = vmatpush.msra.mxu0 %v181
    %287 = vmatpush.msra.mxu0 %v178
    %288 = vmatpush.msra.mxu0 %v175
    %289 = vmatpush.msra.mxu0 %v172
    %290 = vmatpush.msra.mxu0 %v169
    %291 = vmatpush.msra.mxu0 %v166
    %292 = vmatpush.msra.mxu0 %v163
    %293 = vmatpush.msra.mxu0 %v160
    %294 = vmatpush.msra.mxu0 %v157
    %295 = vmatpush.msra.mxu0 %v154
    %296 = vmatpush.msra.mxu0 %v151
    %297 = vmatpush.msra.mxu0 %v148
    %298 = vmatpush.msra.mxu0 %v145
    %299 = vmatpush.msra.mxu0 %v142
    %300 = vmatpush.msra.mxu0 %v139
    %301 = vmatmul.f32.gmra.mxu0 %v136
    %v302 = vpop.f32.mrf.mxu0
    %v303 = vadd.f32 0.0, %v302
    %304 = vmatmul.f32.gmra.mxu0 %v137
    %v305 = vpop.f32.mrf.mxu0
    %v306 = vadd.f32 0.0, %v305
    %307 = vdwg.mxu0
    %308 = vmatpush.msra.mxu0 %v185
    %309 = vmatpush.msra.mxu0 %v182
    %310 = vmatpush.msra.mxu0 %v179
    %311 = vmatpush.msra.mxu0 %v176
    %312 = vmatpush.msra.mxu0 %v173
    %313 = vmatpush.msra.mxu0 %v170
    %314 = vmatpush.msra.mxu0 %v167
    %315 = vmatpush.msra.mxu0 %v164
    %316 = vmatpush.msra.mxu0 %v161
    %317 = vmatpush.msra.mxu0 %v158
    %318 = vmatpush.msra.mxu0 %v155
    %319 = vmatpush.msra.mxu0 %v152
    %320 = vmatpush.msra.mxu0 %v149
    %321 = vmatpush.msra.mxu0 %v146
    %322 = vmatpush.msra.mxu0 %v143
    %323 = vmatpush.msra.mxu0 %v140
    %324 = vmatmul.f32.gmra.mxu0 %v136
    %v325 = vpop.f32.mrf.mxu0
    %v326 = vadd.f32 0.0, %v325
    %327 = vmatmul.f32.gmra.mxu0 %v137
    %v328 = vpop.f32.mrf.mxu0
    %v329 = vadd.f32 0.0, %v328
    %330 = vdwg.mxu0
    %331 = vmatpush.msra.mxu0 %v186
    %332 = vmatpush.msra.mxu0 %v183
    %333 = vmatpush.msra.mxu0 %v180
    %334 = vmatpush.msra.mxu0 %v177
    %335 = vmatpush.msra.mxu0 %v174
    %336 = vmatpush.msra.mxu0 %v171
    %337 = vmatpush.msra.mxu0 %v168
    %338 = vmatpush.msra.mxu0 %v165
    %339 = vmatpush.msra.mxu0 %v162
    %340 = vmatpush.msra.mxu0 %v159
    %341 = vmatpush.msra.mxu0 %v156
    %342 = vmatpush.msra.mxu0 %v153
    %343 = vmatpush.msra.mxu0 %v150
    %344 = vmatpush.msra.mxu0 %v147
    %345 = vmatpush.msra.mxu0 %v144
    %346 = vmatpush.msra.mxu0 %v141
    %347 = vmatmul.f32.gmra.mxu0 %v136
    %v348 = vpop.f32.mrf.mxu0
    %v349 = vadd.f32 0.0, %v348
    %350 = vmatmul.f32.gmra.mxu0 %v137
    %v351 = vpop.f32.mrf.mxu0
    %v352 = vadd.f32 0.0, %v351
    %353 = vdwg.mxu0
    %v354 = vperm.slane %v138, 0
    %v355 = vlaneseq
    %v356 = vshrl.u32 %v355, 7
    %358 = vset.pattern.permute.xlu0 %v356
    %359 = vperm.xlu0 %358, %v354
    %v360 = vpop.permute.xlu0 %359
    %v361 = vperm.slane %v138, 1
    %v362 = vlaneseq
    %v363 = vshrl.u32 %v362, 7
    %365 = vset.pattern.permute.xlu0 %v363
    %366 = vperm.xlu0 %365, %v361
    %v367 = vpop.permute.xlu0 %366
    %v368 = vmul.f32 %v360, %v303
    %v369 = vmul.f32 %v360, %v326
    %v370 = vmul.f32 %v360, %v349
    %v371 = vmul.f32 %v367, %v306
    %v372 = vmul.f32 %v367, %v329
    %v373 = vmul.f32 %v367, %v352
    %v375 = vperm.slane %v187, 0
    %v376 = vperm.slane %v187, 1
    %v377 = vperm.slane %v187, 2
    %v381 = vadd.f32 %v368, %v375
    %v382 = vadd.f32 %v369, %v376
    %v383 = vadd.f32 %v370, %v377
    %v384 = vadd.f32 %v371, %v375
    %v385 = vadd.f32 %v372, %v376
    %v386 = vadd.f32 %v373, %v377
    %v387 = vsub.f32 1.0, %v138
    %v388 = vperm.slane %v387, 0
    %v389 = vlaneseq
    %v390 = vshrl.u32 %v389, 7
    %392 = vset.pattern.permute.xlu0 %v390
    %393 = vperm.xlu0 %392, %v388
    %v394 = vpop.permute.xlu0 %393
    %v395 = vperm.slane %v387, 1
    %v396 = vlaneseq
    %v397 = vshrl.u32 %v396, 7
    %399 = vset.pattern.permute.xlu0 %v397
    %400 = vperm.xlu0 %399, %v395
    %v401 = vpop.permute.xlu0 %400
    %v403 = vperm.slane %v284, 0
    %v404 = vperm.slane %v284, 1
    %v405 = vperm.slane %v284, 2
    %v406 = vperm.slane %v284, 3
    %v407 = vperm.slane %v284, 4
    %v408 = vperm.slane %v284, 5
    %415 = vmatpush.msra.mxu0 %v278
    %416 = vmatpush.msra.mxu0 %v272
    %417 = vmatpush.msra.mxu0 %v266
    %418 = vmatpush.msra.mxu0 %v260
    %419 = vmatpush.msra.mxu0 %v254
    %420 = vmatpush.msra.mxu0 %v248
    %421 = vmatpush.msra.mxu0 %v242
    %422 = vmatpush.msra.mxu0 %v236
    %423 = vmatpush.msra.mxu0 %v230
    %424 = vmatpush.msra.mxu0 %v224
    %425 = vmatpush.msra.mxu0 %v218
    %426 = vmatpush.msra.mxu0 %v212
    %427 = vmatpush.msra.mxu0 %v206
    %428 = vmatpush.msra.mxu0 %v200
    %429 = vmatpush.msra.mxu0 %v194
    %430 = vmatpush.msra.mxu0 %v188
    %431 = vmatmul.f32.gmra.mxu0 0.0
    %v432 = vpop.f32.mrf.mxu0
    %v433 = vadd.f32 %v403, %v432
    %434 = vdwg.mxu0
    %435 = vmatpush.msra.mxu0 %v279
    %436 = vmatpush.msra.mxu0 %v273
    %437 = vmatpush.msra.mxu0 %v267
    %438 = vmatpush.msra.mxu0 %v261
    %439 = vmatpush.msra.mxu0 %v255
    %440 = vmatpush.msra.mxu0 %v249
    %441 = vmatpush.msra.mxu0 %v243
    %442 = vmatpush.msra.mxu0 %v237
    %443 = vmatpush.msra.mxu0 %v231
    %444 = vmatpush.msra.mxu0 %v225
    %445 = vmatpush.msra.mxu0 %v219
    %446 = vmatpush.msra.mxu0 %v213
    %447 = vmatpush.msra.mxu0 %v207
    %448 = vmatpush.msra.mxu0 %v201
    %449 = vmatpush.msra.mxu0 %v195
    %450 = vmatpush.msra.mxu0 %v189
    %451 = vmatmul.f32.gmra.mxu0 0.0
    %v452 = vpop.f32.mrf.mxu0
    %v453 = vadd.f32 %v404, %v452
    %454 = vdwg.mxu0
    %455 = vmatpush.msra.mxu0 %v280
    %456 = vmatpush.msra.mxu0 %v274
    %457 = vmatpush.msra.mxu0 %v268
    %458 = vmatpush.msra.mxu0 %v262
    %459 = vmatpush.msra.mxu0 %v256
    %460 = vmatpush.msra.mxu0 %v250
    %461 = vmatpush.msra.mxu0 %v244
    %462 = vmatpush.msra.mxu0 %v238
    %463 = vmatpush.msra.mxu0 %v232
    %464 = vmatpush.msra.mxu0 %v226
    %465 = vmatpush.msra.mxu0 %v220
    %466 = vmatpush.msra.mxu0 %v214
    %467 = vmatpush.msra.mxu0 %v208
    %468 = vmatpush.msra.mxu0 %v202
    %469 = vmatpush.msra.mxu0 %v196
    %470 = vmatpush.msra.mxu0 %v190
    %471 = vmatmul.f32.gmra.mxu0 0.0
    %v472 = vpop.f32.mrf.mxu0
    %v473 = vadd.f32 %v405, %v472
    %474 = vdwg.mxu0
    %475 = vmatpush.msra.mxu0 %v281
    %476 = vmatpush.msra.mxu0 %v275
    %477 = vmatpush.msra.mxu0 %v269
    %478 = vmatpush.msra.mxu0 %v263
    %479 = vmatpush.msra.mxu0 %v257
    %480 = vmatpush.msra.mxu0 %v251
    %481 = vmatpush.msra.mxu0 %v245
    %482 = vmatpush.msra.mxu0 %v239
    %483 = vmatpush.msra.mxu0 %v233
    %484 = vmatpush.msra.mxu0 %v227
    %485 = vmatpush.msra.mxu0 %v221
    %486 = vmatpush.msra.mxu0 %v215
    %487 = vmatpush.msra.mxu0 %v209
    %488 = vmatpush.msra.mxu0 %v203
    %489 = vmatpush.msra.mxu0 %v197
    %490 = vmatpush.msra.mxu0 %v191
    %491 = vmatmul.f32.gmra.mxu0 0.0
    %v492 = vpop.f32.mrf.mxu0
    %v493 = vadd.f32 %v406, %v492
    %494 = vdwg.mxu0
    %495 = vmatpush.msra.mxu0 %v282
    %496 = vmatpush.msra.mxu0 %v276
    %497 = vmatpush.msra.mxu0 %v270
    %498 = vmatpush.msra.mxu0 %v264
    %499 = vmatpush.msra.mxu0 %v258
    %500 = vmatpush.msra.mxu0 %v252
    %501 = vmatpush.msra.mxu0 %v246
    %502 = vmatpush.msra.mxu0 %v240
    %503 = vmatpush.msra.mxu0 %v234
    %504 = vmatpush.msra.mxu0 %v228
    %505 = vmatpush.msra.mxu0 %v222
    %506 = vmatpush.msra.mxu0 %v216
    %507 = vmatpush.msra.mxu0 %v210
    %508 = vmatpush.msra.mxu0 %v204
    %509 = vmatpush.msra.mxu0 %v198
    %510 = vmatpush.msra.mxu0 %v192
    %511 = vmatmul.f32.gmra.mxu0 0.0
    %v512 = vpop.f32.mrf.mxu0
    %v513 = vadd.f32 %v407, %v512
    %514 = vdwg.mxu0
    %515 = vmatpush.msra.mxu0 %v283
    %516 = vmatpush.msra.mxu0 %v277
    %517 = vmatpush.msra.mxu0 %v271
    %518 = vmatpush.msra.mxu0 %v265
    %519 = vmatpush.msra.mxu0 %v259
    %520 = vmatpush.msra.mxu0 %v253
    %521 = vmatpush.msra.mxu0 %v247
    %522 = vmatpush.msra.mxu0 %v241
    %523 = vmatpush.msra.mxu0 %v235
    %524 = vmatpush.msra.mxu0 %v229
    %525 = vmatpush.msra.mxu0 %v223
    %526 = vmatpush.msra.mxu0 %v217
    %527 = vmatpush.msra.mxu0 %v211
    %528 = vmatpush.msra.mxu0 %v205
    %529 = vmatpush.msra.mxu0 %v199
    %530 = vmatpush.msra.mxu0 %v193
    %531 = vmatmul.f32.gmra.mxu0 0.0
    %v532 = vpop.f32.mrf.mxu0
    %v533 = vadd.f32 %v408, %v532
    %534 = vdwg.mxu0
    %v538 = vrot.slane %v493, 1
    %v539 = vrot.slane %v513, 1
    %v540 = vrot.slane %v533, 1
    %v547 = vmul.f32 %v394, %v493
    %v548 = vmul.f32 %v394, %v513
    %v549 = vmul.f32 %v394, %v533
    %v550 = vmul.f32 %v401, %v538
    %v551 = vmul.f32 %v401, %v539
    %v552 = vmul.f32 %v401, %v540
    %v553 = vadd.f32 %v381, %v547
    %v554 = vadd.f32 %v382, %v548
    %v555 = vadd.f32 %v383, %v549
    %v556 = vadd.f32 %v384, %v550
    %v557 = vadd.f32 %v385, %v551
    %v558 = vadd.f32 %v386, %v552
    %v561 = vrot.slane %v433, 1
    %v562 = vrot.slane %v453, 1
    %v567 = vadd.f32 %v553, %v433
    %v568 = vadd.f32 %v554, %v453
    %v569 = vadd.f32 %v556, %v561
    %v570 = vadd.f32 %v557, %v562
    %v571 = vxor.u32 %v567, 2147483648
    %v572 = vxor.u32 %v569, 2147483648
    %v573 = vmul.f32 %v571, 1.442695
    %v574 = vpow.pop %v573
    %v575 = vmul.f32 %v572, 1.442695
    %v576 = vpow.pop %v575
    %v577 = vadd.f32 %v574, 1.0
    %v578 = vadd.f32 %v576, 1.0
    %v579 = vrcp.pop %v577
    %v580 = vmul.f32 %v577, %v579
    %v581 = vsub.f32 1.0, %v580
    %v582 = vmul.f32 %v579, %v581
    %v583 = vadd.f32 %v579, %v582
    %vm584 = vweird.f32 %v577
    %vm585 = vweird.f32 %v579
    %vm586 = vmor %vm584, %vm585
    %v587 = vsel %vm586, %v579, %v583
    %v588 = vand.u32 2147483647, %v577
    %vm589 = vcmp.eq.f32.partialorder %v588, 8.507059e+37
    %v590 = vand.u32 %v577, 2147483648
    %v591 = vor.u32 1.1754944e-38, %v590
    %v592 = vsel %vm589, %v591, %v587
    %v593 = vmul.f32 1.0, %v592
    %v594 = vrcp.pop %v578
    %v595 = vmul.f32 %v578, %v594
    %v596 = vsub.f32 1.0, %v595
    %v597 = vmul.f32 %v594, %v596
    %v598 = vadd.f32 %v594, %v597
    %vm599 = vweird.f32 %v578
    %vm600 = vweird.f32 %v594
    %vm601 = vmor %vm599, %vm600
    %v602 = vsel %vm601, %v594, %v598
    %v603 = vand.u32 2147483647, %v578
    %vm604 = vcmp.eq.f32.partialorder %v603, 8.507059e+37
    %v605 = vand.u32 %v578, 2147483648
    %v606 = vor.u32 1.1754944e-38, %v605
    %v607 = vsel %vm604, %v606, %v602
    %v608 = vmul.f32 1.0, %v607
    %v609 = vxor.u32 %v568, 2147483648
    %v610 = vxor.u32 %v570, 2147483648
    %v611 = vmul.f32 %v609, 1.442695
    %v612 = vpow.pop %v611
    %v613 = vmul.f32 %v610, 1.442695
    %v614 = vpow.pop %v613
    %v615 = vadd.f32 %v612, 1.0
    %v616 = vadd.f32 %v614, 1.0
    %v617 = vrcp.pop %v615
    %v618 = vmul.f32 %v615, %v617
    %v619 = vsub.f32 1.0, %v618
    %v620 = vmul.f32 %v617, %v619
    %v621 = vadd.f32 %v617, %v620
    %vm622 = vweird.f32 %v615
    %vm623 = vweird.f32 %v617
    %vm624 = vmor %vm622, %vm623
    %v625 = vsel %vm624, %v617, %v621
    %v626 = vand.u32 2147483647, %v615
    %vm627 = vcmp.eq.f32.partialorder %v626, 8.507059e+37
    %v628 = vand.u32 %v615, 2147483648
    %v629 = vor.u32 1.1754944e-38, %v628
    %v630 = vsel %vm627, %v629, %v625
    %v631 = vmul.f32 1.0, %v630
    %v632 = vrcp.pop %v616
    %v633 = vmul.f32 %v616, %v632
    %v634 = vsub.f32 1.0, %v633
    %v635 = vmul.f32 %v632, %v634
    %v636 = vadd.f32 %v632, %v635
    %vm637 = vweird.f32 %v616
    %vm638 = vweird.f32 %v632
    %vm639 = vmor %vm637, %vm638
    %v640 = vsel %vm639, %v632, %v636
    %v641 = vand.u32 2147483647, %v616
    %vm642 = vcmp.eq.f32.partialorder %v641, 8.507059e+37
    %v643 = vand.u32 %v616, 2147483648
    %v644 = vor.u32 1.1754944e-38, %v643
    %v645 = vsel %vm642, %v644, %v640
    %v646 = vmul.f32 1.0, %v645
    %v648 = vrot.slane %v473, 1
    %v651 = vmul.f32 %v593, %v473
    %v652 = vmul.f32 %v608, %v648
    %v653 = vadd.f32 %v555, %v651
    %v654 = vadd.f32 %v558, %v652
    %v655 = vtanh.pop %v653
    %v656 = vtanh.pop %v654
    %v657 = vsub.f32 1.0, %v631
    %v658 = vsub.f32 1.0, %v646
    %v659 = vmul.f32 %v657, %v655
    %v660 = vmul.f32 %v658, %v656
    %v661 = vmul.f32 %v631, 0.0
    %v662 = vmul.f32 %v646, 0.0
    %v663 = vadd.f32 %v659, %v661
    %v664 = vadd.f32 %v660, %v662
    %v667 = vrot.slane %v664, 7
    %vm668 = vcmask 1041409
    %v669 = vsel %vm668, %v667, %v663
    %671 = vmatpush.msra.mxu0 %v278
    %672 = vmatpush.msra.mxu0 %v272
    %673 = vmatpush.msra.mxu0 %v266
    %674 = vmatpush.msra.mxu0 %v260
    %675 = vmatpush.msra.mxu0 %v254
    %676 = vmatpush.msra.mxu0 %v248
    %677 = vmatpush.msra.mxu0 %v242
    %678 = vmatpush.msra.mxu0 %v236
    %679 = vmatpush.msra.mxu0 %v230
    %680 = vmatpush.msra.mxu0 %v224
    %681 = vmatpush.msra.mxu0 %v218
    %682 = vmatpush.msra.mxu0 %v212
    %683 = vmatpush.msra.mxu0 %v206
    %684 = vmatpush.msra.mxu0 %v200
    %685 = vmatpush.msra.mxu0 %v194
    %686 = vmatpush.msra.mxu0 %v188
    %687 = vmatmul.f32.gmra.mxu0 %v669
    %v688 = vpop.f32.mrf.mxu0
    %v689 = vadd.f32 %v403, %v688
    %690 = vdwg.mxu0
    %691 = vmatpush.msra.mxu0 %v279
    %692 = vmatpush.msra.mxu0 %v273
    %693 = vmatpush.msra.mxu0 %v267
    %694 = vmatpush.msra.mxu0 %v261
    %695 = vmatpush.msra.mxu0 %v255
    %696 = vmatpush.msra.mxu0 %v249
    %697 = vmatpush.msra.mxu0 %v243
    %698 = vmatpush.msra.mxu0 %v237
    %699 = vmatpush.msra.mxu0 %v231
    %700 = vmatpush.msra.mxu0 %v225
    %701 = vmatpush.msra.mxu0 %v219
    %702 = vmatpush.msra.mxu0 %v213
    %703 = vmatpush.msra.mxu0 %v207
    %704 = vmatpush.msra.mxu0 %v201
    %705 = vmatpush.msra.mxu0 %v195
    %706 = vmatpush.msra.mxu0 %v189
    %707 = vmatmul.f32.gmra.mxu0 %v669
    %v708 = vpop.f32.mrf.mxu0
    %v709 = vadd.f32 %v404, %v708
    %710 = vdwg.mxu0
    %711 = vmatpush.msra.mxu0 %v280
    %712 = vmatpush.msra.mxu0 %v274
    %713 = vmatpush.msra.mxu0 %v268
    %714 = vmatpush.msra.mxu0 %v262
    %715 = vmatpush.msra.mxu0 %v256
    %716 = vmatpush.msra.mxu0 %v250
    %717 = vmatpush.msra.mxu0 %v244
    %718 = vmatpush.msra.mxu0 %v238
    %719 = vmatpush.msra.mxu0 %v232
    %720 = vmatpush.msra.mxu0 %v226
    %721 = vmatpush.msra.mxu0 %v220
    %722 = vmatpush.msra.mxu0 %v214
    %723 = vmatpush.msra.mxu0 %v208
    %724 = vmatpush.msra.mxu0 %v202
    %725 = vmatpush.msra.mxu0 %v196
    %726 = vmatpush.msra.mxu0 %v190
    %727 = vmatmul.f32.gmra.mxu0 %v669
    %v728 = vpop.f32.mrf.mxu0
    %v729 = vadd.f32 %v405, %v728
    %730 = vdwg.mxu0
    %731 = vmatpush.msra.mxu0 %v281
    %732 = vmatpush.msra.mxu0 %v275
    %733 = vmatpush.msra.mxu0 %v269
    %734 = vmatpush.msra.mxu0 %v263
    %735 = vmatpush.msra.mxu0 %v257
    %736 = vmatpush.msra.mxu0 %v251
    %737 = vmatpush.msra.mxu0 %v245
    %738 = vmatpush.msra.mxu0 %v239
    %739 = vmatpush.msra.mxu0 %v233
    %740 = vmatpush.msra.mxu0 %v227
    %741 = vmatpush.msra.mxu0 %v221
    %742 = vmatpush.msra.mxu0 %v215
    %743 = vmatpush.msra.mxu0 %v209
    %744 = vmatpush.msra.mxu0 %v203
    %745 = vmatpush.msra.mxu0 %v197
    %746 = vmatpush.msra.mxu0 %v191
    %747 = vmatmul.f32.gmra.mxu0 %v669
    %v748 = vpop.f32.mrf.mxu0
    %v749 = vadd.f32 %v406, %v748
    %750 = vdwg.mxu0
    %751 = vmatpush.msra.mxu0 %v282
    %752 = vmatpush.msra.mxu0 %v276
    %753 = vmatpush.msra.mxu0 %v270
    %754 = vmatpush.msra.mxu0 %v264
    %755 = vmatpush.msra.mxu0 %v258
    %756 = vmatpush.msra.mxu0 %v252
    %757 = vmatpush.msra.mxu0 %v246
    %758 = vmatpush.msra.mxu0 %v240
    %759 = vmatpush.msra.mxu0 %v234
    %760 = vmatpush.msra.mxu0 %v228
    %761 = vmatpush.msra.mxu0 %v222
    %762 = vmatpush.msra.mxu0 %v216
    %763 = vmatpush.msra.mxu0 %v210
    %764 = vmatpush.msra.mxu0 %v204
    %765 = vmatpush.msra.mxu0 %v198
    %766 = vmatpush.msra.mxu0 %v192
    %767 = vmatmul.f32.gmra.mxu0 %v669
    %v768 = vpop.f32.mrf.mxu0
    %v769 = vadd.f32 %v407, %v768
    %770 = vdwg.mxu0
    %771 = vmatpush.msra.mxu0 %v283
    %772 = vmatpush.msra.mxu0 %v277
    %773 = vmatpush.msra.mxu0 %v271
    %774 = vmatpush.msra.mxu0 %v265
    %775 = vmatpush.msra.mxu0 %v259
    %776 = vmatpush.msra.mxu0 %v253
    %777 = vmatpush.msra.mxu0 %v247
    %778 = vmatpush.msra.mxu0 %v241
    %779 = vmatpush.msra.mxu0 %v235
    %780 = vmatpush.msra.mxu0 %v229
    %781 = vmatpush.msra.mxu0 %v223
    %782 = vmatpush.msra.mxu0 %v217
    %783 = vmatpush.msra.mxu0 %v211
    %784 = vmatpush.msra.mxu0 %v205
    %785 = vmatpush.msra.mxu0 %v199
    %786 = vmatpush.msra.mxu0 %v193
    %787 = vmatmul.f32.gmra.mxu0 %v669
    %v788 = vpop.f32.mrf.mxu0
    %v789 = vadd.f32 %v408, %v788
    %790 = vdwg.mxu0
    %v794 = vrot.slane %v749, 7
    %v795 = vrot.slane %v769, 7
    %v796 = vrot.slane %v789, 7
    %v803 = vmul.f32 %v394, %v794
    %v804 = vmul.f32 %v394, %v795
    %v805 = vmul.f32 %v394, %v796
    %v806 = vmul.f32 %v401, %v749
    %v807 = vmul.f32 %v401, %v769
    %v808 = vmul.f32 %v401, %v789
    %v809 = vadd.f32 %v381, %v803
    %v810 = vadd.f32 %v382, %v804
    %v811 = vadd.f32 %v383, %v805
    %v812 = vadd.f32 %v384, %v806
    %v813 = vadd.f32 %v385, %v807
    %v814 = vadd.f32 %v386, %v808
    %v817 = vrot.slane %v689, 7
    %v818 = vrot.slane %v709, 7
    %v823 = vadd.f32 %v809, %v817
    %v824 = vadd.f32 %v810, %v818
    %v825 = vadd.f32 %v812, %v689
    %v826 = vadd.f32 %v813, %v709
    %v827 = vxor.u32 %v823, 2147483648
    %v828 = vxor.u32 %v825, 2147483648
    %v829 = vmul.f32 %v827, 1.442695
    %v830 = vpow.pop %v829
    %v831 = vmul.f32 %v828, 1.442695
    %v832 = vpow.pop %v831
    %v833 = vadd.f32 %v830, 1.0
    %v834 = vadd.f32 %v832, 1.0
    %v835 = vrcp.pop %v833
    %v836 = vmul.f32 %v833, %v835
    %v837 = vsub.f32 1.0, %v836
    %v838 = vmul.f32 %v835, %v837
    %v839 = vadd.f32 %v835, %v838
    %vm840 = vweird.f32 %v833
    %vm841 = vweird.f32 %v835
    %vm842 = vmor %vm840, %vm841
    %v843 = vsel %vm842, %v835, %v839
    %v844 = vand.u32 2147483647, %v833
    %vm845 = vcmp.eq.f32.partialorder %v844, 8.507059e+37
    %v846 = vand.u32 %v833, 2147483648
    %v847 = vor.u32 1.1754944e-38, %v846
    %v848 = vsel %vm845, %v847, %v843
    %v849 = vmul.f32 1.0, %v848
    %v850 = vrcp.pop %v834
    %v851 = vmul.f32 %v834, %v850
    %v852 = vsub.f32 1.0, %v851
    %v853 = vmul.f32 %v850, %v852
    %v854 = vadd.f32 %v850, %v853
    %vm855 = vweird.f32 %v834
    %vm856 = vweird.f32 %v850
    %vm857 = vmor %vm855, %vm856
    %v858 = vsel %vm857, %v850, %v854
    %v859 = vand.u32 2147483647, %v834
    %vm860 = vcmp.eq.f32.partialorder %v859, 8.507059e+37
    %v861 = vand.u32 %v834, 2147483648
    %v862 = vor.u32 1.1754944e-38, %v861
    %v863 = vsel %vm860, %v862, %v858
    %v864 = vmul.f32 1.0, %v863
    %v865 = vxor.u32 %v824, 2147483648
    %v866 = vxor.u32 %v826, 2147483648
    %v867 = vmul.f32 %v865, 1.442695
    %v868 = vpow.pop %v867
    %v869 = vmul.f32 %v866, 1.442695
    %v870 = vpow.pop %v869
    %v871 = vadd.f32 %v868, 1.0
    %v872 = vadd.f32 %v870, 1.0
    %v873 = vrcp.pop %v871
    %v874 = vmul.f32 %v871, %v873
    %v875 = vsub.f32 1.0, %v874
    %v876 = vmul.f32 %v873, %v875
    %v877 = vadd.f32 %v873, %v876
    %vm878 = vweird.f32 %v871
    %vm879 = vweird.f32 %v873
    %vm880 = vmor %vm878, %vm879
    %v881 = vsel %vm880, %v873, %v877
    %v882 = vand.u32 2147483647, %v871
    %vm883 = vcmp.eq.f32.partialorder %v882, 8.507059e+37
    %v884 = vand.u32 %v871, 2147483648
    %v885 = vor.u32 1.1754944e-38, %v884
    %v886 = vsel %vm883, %v885, %v881
    %v887 = vmul.f32 1.0, %v886
    %v888 = vrcp.pop %v872
    %v889 = vmul.f32 %v872, %v888
    %v890 = vsub.f32 1.0, %v889
    %v891 = vmul.f32 %v888, %v890
    %v892 = vadd.f32 %v888, %v891
    %vm893 = vweird.f32 %v872
    %vm894 = vweird.f32 %v888
    %vm895 = vmor %vm893, %vm894
    %v896 = vsel %vm895, %v888, %v892
    %v897 = vand.u32 2147483647, %v872
    %vm898 = vcmp.eq.f32.partialorder %v897, 8.507059e+37
    %v899 = vand.u32 %v872, 2147483648
    %v900 = vor.u32 1.1754944e-38, %v899
    %v901 = vsel %vm898, %v900, %v896
    %v902 = vmul.f32 1.0, %v901
    %v904 = vrot.slane %v729, 7
    %v907 = vmul.f32 %v849, %v904
    %v908 = vmul.f32 %v864, %v729
    %v909 = vadd.f32 %v811, %v907
    %v910 = vadd.f32 %v814, %v908
    %v911 = vtanh.pop %v909
    %v912 = vtanh.pop %v910
    %v913 = vsub.f32 1.0, %v887
    %v914 = vsub.f32 1.0, %v902
    %v915 = vmul.f32 %v913, %v911
    %v916 = vmul.f32 %v914, %v912
    %v917 = vrot.slane %v663, 7
    %v920 = vmul.f32 %v887, %v917
    %v921 = vmul.f32 %v902, %v667
    %v922 = vadd.f32 %v915, %v920
    %v923 = vadd.f32 %v916, %v921
    %v926 = vrot.slane %v922, 1
    %v927 = vsel %vm668, %v923, %v926
    %929 = vmatpush.msra.mxu0 %v278
    %930 = vmatpush.msra.mxu0 %v272
    %931 = vmatpush.msra.mxu0 %v266
    %932 = vmatpush.msra.mxu0 %v260
    %933 = vmatpush.msra.mxu0 %v254
    %934 = vmatpush.msra.mxu0 %v248
    %935 = vmatpush.msra.mxu0 %v242
    %936 = vmatpush.msra.mxu0 %v236
    %937 = vmatpush.msra.mxu0 %v230
    %938 = vmatpush.msra.mxu0 %v224
    %939 = vmatpush.msra.mxu0 %v218
    %940 = vmatpush.msra.mxu0 %v212
    %941 = vmatpush.msra.mxu0 %v206
    %942 = vmatpush.msra.mxu0 %v200
    %943 = vmatpush.msra.mxu0 %v194
    %944 = vmatpush.msra.mxu0 %v188
    %945 = vmatmul.f32.gmra.mxu0 %v927
    %v946 = vpop.f32.mrf.mxu0
    %v947 = vadd.f32 %v403, %v946
    %948 = vdwg.mxu0
    %949 = vmatpush.msra.mxu0 %v279
    %950 = vmatpush.msra.mxu0 %v273
    %951 = vmatpush.msra.mxu0 %v267
    %952 = vmatpush.msra.mxu0 %v261
    %953 = vmatpush.msra.mxu0 %v255
    %954 = vmatpush.msra.mxu0 %v249
    %955 = vmatpush.msra.mxu0 %v243
    %956 = vmatpush.msra.mxu0 %v237
    %957 = vmatpush.msra.mxu0 %v231
    %958 = vmatpush.msra.mxu0 %v225
    %959 = vmatpush.msra.mxu0 %v219
    %960 = vmatpush.msra.mxu0 %v213
    %961 = vmatpush.msra.mxu0 %v207
    %962 = vmatpush.msra.mxu0 %v201
    %963 = vmatpush.msra.mxu0 %v195
    %964 = vmatpush.msra.mxu0 %v189
    %965 = vmatmul.f32.gmra.mxu0 %v927
    %v966 = vpop.f32.mrf.mxu0
    %v967 = vadd.f32 %v404, %v966
    %968 = vdwg.mxu0
    %969 = vmatpush.msra.mxu0 %v280
    %970 = vmatpush.msra.mxu0 %v274
    %971 = vmatpush.msra.mxu0 %v268
    %972 = vmatpush.msra.mxu0 %v262
    %973 = vmatpush.msra.mxu0 %v256
    %974 = vmatpush.msra.mxu0 %v250
    %975 = vmatpush.msra.mxu0 %v244
    %976 = vmatpush.msra.mxu0 %v238
    %977 = vmatpush.msra.mxu0 %v232
    %978 = vmatpush.msra.mxu0 %v226
    %979 = vmatpush.msra.mxu0 %v220
    %980 = vmatpush.msra.mxu0 %v214
    %981 = vmatpush.msra.mxu0 %v208
    %982 = vmatpush.msra.mxu0 %v202
    %983 = vmatpush.msra.mxu0 %v196
    %984 = vmatpush.msra.mxu0 %v190
    %985 = vmatmul.f32.gmra.mxu0 %v927
    %v986 = vpop.f32.mrf.mxu0
    %v987 = vadd.f32 %v405, %v986
    %988 = vdwg.mxu0
    %989 = vmatpush.msra.mxu0 %v281
    %990 = vmatpush.msra.mxu0 %v275
    %991 = vmatpush.msra.mxu0 %v269
    %992 = vmatpush.msra.mxu0 %v263
    %993 = vmatpush.msra.mxu0 %v257
    %994 = vmatpush.msra.mxu0 %v251
    %995 = vmatpush.msra.mxu0 %v245
    %996 = vmatpush.msra.mxu0 %v239
    %997 = vmatpush.msra.mxu0 %v233
    %998 = vmatpush.msra.mxu0 %v227
    %999 = vmatpush.msra.mxu0 %v221
    %1000 = vmatpush.msra.mxu0 %v215
    %1001 = vmatpush.msra.mxu0 %v209
    %1002 = vmatpush.msra.mxu0 %v203
    %1003 = vmatpush.msra.mxu0 %v197
    %1004 = vmatpush.msra.mxu0 %v191
    %1005 = vmatmul.f32.gmra.mxu0 %v927
    %v1006 = vpop.f32.mrf.mxu0
    %v1007 = vadd.f32 %v406, %v1006
    %1008 = vdwg.mxu0
    %1009 = vmatpush.msra.mxu0 %v282
    %1010 = vmatpush.msra.mxu0 %v276
    %1011 = vmatpush.msra.mxu0 %v270
    %1012 = vmatpush.msra.mxu0 %v264
    %1013 = vmatpush.msra.mxu0 %v258
    %1014 = vmatpush.msra.mxu0 %v252
    %1015 = vmatpush.msra.mxu0 %v246
    %1016 = vmatpush.msra.mxu0 %v240
    %1017 = vmatpush.msra.mxu0 %v234
    %1018 = vmatpush.msra.mxu0 %v228
    %1019 = vmatpush.msra.mxu0 %v222
    %1020 = vmatpush.msra.mxu0 %v216
    %1021 = vmatpush.msra.mxu0 %v210
    %1022 = vmatpush.msra.mxu0 %v204
    %1023 = vmatpush.msra.mxu0 %v198
    %1024 = vmatpush.msra.mxu0 %v192
    %1025 = vmatmul.f32.gmra.mxu0 %v927
    %v1026 = vpop.f32.mrf.mxu0
    %v1027 = vadd.f32 %v407, %v1026
    %1028 = vdwg.mxu0
    %1029 = vmatpush.msra.mxu0 %v283
    %1030 = vmatpush.msra.mxu0 %v277
    %1031 = vmatpush.msra.mxu0 %v271
    %1032 = vmatpush.msra.mxu0 %v265
    %1033 = vmatpush.msra.mxu0 %v259
    %1034 = vmatpush.msra.mxu0 %v253
    %1035 = vmatpush.msra.mxu0 %v247
    %1036 = vmatpush.msra.mxu0 %v241
    %1037 = vmatpush.msra.mxu0 %v235
    %1038 = vmatpush.msra.mxu0 %v229
    %1039 = vmatpush.msra.mxu0 %v223
    %1040 = vmatpush.msra.mxu0 %v217
    %1041 = vmatpush.msra.mxu0 %v211
    %1042 = vmatpush.msra.mxu0 %v205
    %1043 = vmatpush.msra.mxu0 %v199
    %1044 = vmatpush.msra.mxu0 %v193
    %1045 = vmatmul.f32.gmra.mxu0 %v927
    %v1046 = vpop.f32.mrf.mxu0
    %v1047 = vadd.f32 %v408, %v1046
    %1048 = vdwg.mxu0
    %v1052 = vrot.slane %v1007, 6
    %v1053 = vrot.slane %v1027, 6
    %v1054 = vrot.slane %v1047, 6
    %v1055 = vrot.slane %v1007, 7
    %v1056 = vrot.slane %v1027, 7
    %v1057 = vrot.slane %v1047, 7
    %v1064 = vmul.f32 %v394, %v1052
    %v1065 = vmul.f32 %v394, %v1053
    %v1066 = vmul.f32 %v394, %v1054
    %v1067 = vmul.f32 %v401, %v1055
    %v1068 = vmul.f32 %v401, %v1056
    %v1069 = vmul.f32 %v401, %v1057
    %v1070 = vadd.f32 %v381, %v1064
    %v1071 = vadd.f32 %v382, %v1065
    %v1072 = vadd.f32 %v383, %v1066
    %v1073 = vadd.f32 %v384, %v1067
    %v1074 = vadd.f32 %v385, %v1068
    %v1075 = vadd.f32 %v386, %v1069
    %v1078 = vrot.slane %v947, 6
    %v1079 = vrot.slane %v967, 6
    %v1080 = vrot.slane %v947, 7
    %v1081 = vrot.slane %v967, 7
    %v1086 = vadd.f32 %v1070, %v1078
    %v1087 = vadd.f32 %v1071, %v1079
    %v1088 = vadd.f32 %v1073, %v1080
    %v1089 = vadd.f32 %v1074, %v1081
    %v1090 = vxor.u32 %v1086, 2147483648
    %v1091 = vxor.u32 %v1088, 2147483648
    %v1092 = vmul.f32 %v1090, 1.442695
    %v1093 = vpow.pop %v1092
    %v1094 = vmul.f32 %v1091, 1.442695
    %v1095 = vpow.pop %v1094
    %v1096 = vadd.f32 %v1093, 1.0
    %v1097 = vadd.f32 %v1095, 1.0
    %v1098 = vrcp.pop %v1096
    %v1099 = vmul.f32 %v1096, %v1098
    %v1100 = vsub.f32 1.0, %v1099
    %v1101 = vmul.f32 %v1098, %v1100
    %v1102 = vadd.f32 %v1098, %v1101
    %vm1103 = vweird.f32 %v1096
    %vm1104 = vweird.f32 %v1098
    %vm1105 = vmor %vm1103, %vm1104
    %v1106 = vsel %vm1105, %v1098, %v1102
    %v1107 = vand.u32 2147483647, %v1096
    %vm1108 = vcmp.eq.f32.partialorder %v1107, 8.507059e+37
    %v1109 = vand.u32 %v1096, 2147483648
    %v1110 = vor.u32 1.1754944e-38, %v1109
    %v1111 = vsel %vm1108, %v1110, %v1106
    %v1112 = vmul.f32 1.0, %v1111
    %v1113 = vrcp.pop %v1097
    %v1114 = vmul.f32 %v1097, %v1113
    %v1115 = vsub.f32 1.0, %v1114
    %v1116 = vmul.f32 %v1113, %v1115
    %v1117 = vadd.f32 %v1113, %v1116
    %vm1118 = vweird.f32 %v1097
    %vm1119 = vweird.f32 %v1113
    %vm1120 = vmor %vm1118, %vm1119
    %v1121 = vsel %vm1120, %v1113, %v1117
    %v1122 = vand.u32 2147483647, %v1097
    %vm1123 = vcmp.eq.f32.partialorder %v1122, 8.507059e+37
    %v1124 = vand.u32 %v1097, 2147483648
    %v1125 = vor.u32 1.1754944e-38, %v1124
    %v1126 = vsel %vm1123, %v1125, %v1121
    %v1127 = vmul.f32 1.0, %v1126
    %v1128 = vxor.u32 %v1087, 2147483648
    %v1129 = vxor.u32 %v1089, 2147483648
    %v1130 = vmul.f32 %v1128, 1.442695
    %v1131 = vpow.pop %v1130
    %v1132 = vmul.f32 %v1129, 1.442695
    %v1133 = vpow.pop %v1132
    %v1134 = vadd.f32 %v1131, 1.0
    %v1135 = vadd.f32 %v1133, 1.0
    %v1136 = vrcp.pop %v1134
    %v1137 = vmul.f32 %v1134, %v1136
    %v1138 = vsub.f32 1.0, %v1137
    %v1139 = vmul.f32 %v1136, %v1138
    %v1140 = vadd.f32 %v1136, %v1139
    %vm1141 = vweird.f32 %v1134
    %vm1142 = vweird.f32 %v1136
    %vm1143 = vmor %vm1141, %vm1142
    %v1144 = vsel %vm1143, %v1136, %v1140
    %v1145 = vand.u32 2147483647, %v1134
    %vm1146 = vcmp.eq.f32.partialorder %v1145, 8.507059e+37
    %v1147 = vand.u32 %v1134, 2147483648
    %v1148 = vor.u32 1.1754944e-38, %v1147
    %v1149 = vsel %vm1146, %v1148, %v1144
    %v1150 = vmul.f32 1.0, %v1149
    %v1151 = vrcp.pop %v1135
    %v1152 = vmul.f32 %v1135, %v1151
    %v1153 = vsub.f32 1.0, %v1152
    %v1154 = vmul.f32 %v1151, %v1153
    %v1155 = vadd.f32 %v1151, %v1154
    %vm1156 = vweird.f32 %v1135
    %vm1157 = vweird.f32 %v1151
    %vm1158 = vmor %vm1156, %vm1157
    %v1159 = vsel %vm1158, %v1151, %v1155
    %v1160 = vand.u32 2147483647, %v1135
    %vm1161 = vcmp.eq.f32.partialorder %v1160, 8.507059e+37
    %v1162 = vand.u32 %v1135, 2147483648
    %v1163 = vor.u32 1.1754944e-38, %v1162
    %v1164 = vsel %vm1161, %v1163, %v1159
    %v1165 = vmul.f32 1.0, %v1164
    %v1167 = vrot.slane %v987, 6
    %v1168 = vrot.slane %v987, 7
    %v1171 = vmul.f32 %v1112, %v1167
    %v1172 = vmul.f32 %v1127, %v1168
    %v1173 = vadd.f32 %v1072, %v1171
    %v1174 = vadd.f32 %v1075, %v1172
    %v1175 = vtanh.pop %v1173
    %v1176 = vtanh.pop %v1174
    %v1177 = vsub.f32 1.0, %v1150
    %v1178 = vsub.f32 1.0, %v1165
    %v1179 = vmul.f32 %v1177, %v1175
    %v1180 = vmul.f32 %v1178, %v1176
    %v1181 = vrot.slane %v922, 7
    %v1182 = vrot.slane %v923, 7
    %v1185 = vmul.f32 %v1150, %v1181
    %v1186 = vmul.f32 %v1165, %v1182
    %v1187 = vadd.f32 %v1179, %v1185
    %v1188 = vadd.f32 %v1180, %v1186
    %v1191 = vrot.slane %v1187, 2
    %v1192 = vrot.slane %v1188, 1
    %v1193 = vsel %vm668, %v1192, %v1191
    %1195 = vmatpush.msra.mxu0 %v278
    %1196 = vmatpush.msra.mxu0 %v272
    %1197 = vmatpush.msra.mxu0 %v266
    %1198 = vmatpush.msra.mxu0 %v260
    %1199 = vmatpush.msra.mxu0 %v254
    %1200 = vmatpush.msra.mxu0 %v248
    %1201 = vmatpush.msra.mxu0 %v242
    %1202 = vmatpush.msra.mxu0 %v236
    %1203 = vmatpush.msra.mxu0 %v230
    %1204 = vmatpush.msra.mxu0 %v224
    %1205 = vmatpush.msra.mxu0 %v218
    %1206 = vmatpush.msra.mxu0 %v212
    %1207 = vmatpush.msra.mxu0 %v206
    %1208 = vmatpush.msra.mxu0 %v200
    %1209 = vmatpush.msra.mxu0 %v194
    %1210 = vmatpush.msra.mxu0 %v188
    %1211 = vmatmul.f32.gmra.mxu0 %v1193
    %v1212 = vpop.f32.mrf.mxu0
    %v1213 = vadd.f32 %v403, %v1212
    %1214 = vdwg.mxu0
    %1215 = vmatpush.msra.mxu0 %v279
    %1216 = vmatpush.msra.mxu0 %v273
    %1217 = vmatpush.msra.mxu0 %v267
    %1218 = vmatpush.msra.mxu0 %v261
    %1219 = vmatpush.msra.mxu0 %v255
    %1220 = vmatpush.msra.mxu0 %v249
    %1221 = vmatpush.msra.mxu0 %v243
    %1222 = vmatpush.msra.mxu0 %v237
    %1223 = vmatpush.msra.mxu0 %v231
    %1224 = vmatpush.msra.mxu0 %v225
    %1225 = vmatpush.msra.mxu0 %v219
    %1226 = vmatpush.msra.mxu0 %v213
    %1227 = vmatpush.msra.mxu0 %v207
    %1228 = vmatpush.msra.mxu0 %v201
    %1229 = vmatpush.msra.mxu0 %v195
    %1230 = vmatpush.msra.mxu0 %v189
    %1231 = vmatmul.f32.gmra.mxu0 %v1193
    %v1232 = vpop.f32.mrf.mxu0
    %v1233 = vadd.f32 %v404, %v1232
    %1234 = vdwg.mxu0
    %1235 = vmatpush.msra.mxu0 %v280
    %1236 = vmatpush.msra.mxu0 %v274
    %1237 = vmatpush.msra.mxu0 %v268
    %1238 = vmatpush.msra.mxu0 %v262
    %1239 = vmatpush.msra.mxu0 %v256
    %1240 = vmatpush.msra.mxu0 %v250
    %1241 = vmatpush.msra.mxu0 %v244
    %1242 = vmatpush.msra.mxu0 %v238
    %1243 = vmatpush.msra.mxu0 %v232
    %1244 = vmatpush.msra.mxu0 %v226
    %1245 = vmatpush.msra.mxu0 %v220
    %1246 = vmatpush.msra.mxu0 %v214
    %1247 = vmatpush.msra.mxu0 %v208
    %1248 = vmatpush.msra.mxu0 %v202
    %1249 = vmatpush.msra.mxu0 %v196
    %1250 = vmatpush.msra.mxu0 %v190
    %1251 = vmatmul.f32.gmra.mxu0 %v1193
    %v1252 = vpop.f32.mrf.mxu0
    %v1253 = vadd.f32 %v405, %v1252
    %1254 = vdwg.mxu0
    %1255 = vmatpush.msra.mxu0 %v281
    %1256 = vmatpush.msra.mxu0 %v275
    %1257 = vmatpush.msra.mxu0 %v269
    %1258 = vmatpush.msra.mxu0 %v263
    %1259 = vmatpush.msra.mxu0 %v257
    %1260 = vmatpush.msra.mxu0 %v251
    %1261 = vmatpush.msra.mxu0 %v245
    %1262 = vmatpush.msra.mxu0 %v239
    %1263 = vmatpush.msra.mxu0 %v233
    %1264 = vmatpush.msra.mxu0 %v227
    %1265 = vmatpush.msra.mxu0 %v221
    %1266 = vmatpush.msra.mxu0 %v215
    %1267 = vmatpush.msra.mxu0 %v209
    %1268 = vmatpush.msra.mxu0 %v203
    %1269 = vmatpush.msra.mxu0 %v197
    %1270 = vmatpush.msra.mxu0 %v191
    %1271 = vmatmul.f32.gmra.mxu0 %v1193
    %v1272 = vpop.f32.mrf.mxu0
    %v1273 = vadd.f32 %v406, %v1272
    %1274 = vdwg.mxu0
    %1275 = vmatpush.msra.mxu0 %v282
    %1276 = vmatpush.msra.mxu0 %v276
    %1277 = vmatpush.msra.mxu0 %v270
    %1278 = vmatpush.msra.mxu0 %v264
    %1279 = vmatpush.msra.mxu0 %v258
    %1280 = vmatpush.msra.mxu0 %v252
    %1281 = vmatpush.msra.mxu0 %v246
    %1282 = vmatpush.msra.mxu0 %v240
    %1283 = vmatpush.msra.mxu0 %v234
    %1284 = vmatpush.msra.mxu0 %v228
    %1285 = vmatpush.msra.mxu0 %v222
    %1286 = vmatpush.msra.mxu0 %v216
    %1287 = vmatpush.msra.mxu0 %v210
    %1288 = vmatpush.msra.mxu0 %v204
    %1289 = vmatpush.msra.mxu0 %v198
    %1290 = vmatpush.msra.mxu0 %v192
    %1291 = vmatmul.f32.gmra.mxu0 %v1193
    %v1292 = vpop.f32.mrf.mxu0
    %v1293 = vadd.f32 %v407, %v1292
    %1294 = vdwg.mxu0
    %1295 = vmatpush.msra.mxu0 %v283
    %1296 = vmatpush.msra.mxu0 %v277
    %1297 = vmatpush.msra.mxu0 %v271
    %1298 = vmatpush.msra.mxu0 %v265
    %1299 = vmatpush.msra.mxu0 %v259
    %1300 = vmatpush.msra.mxu0 %v253
    %1301 = vmatpush.msra.mxu0 %v247
    %1302 = vmatpush.msra.mxu0 %v241
    %1303 = vmatpush.msra.mxu0 %v235
    %1304 = vmatpush.msra.mxu0 %v229
    %1305 = vmatpush.msra.mxu0 %v223
    %1306 = vmatpush.msra.mxu0 %v217
    %1307 = vmatpush.msra.mxu0 %v211
    %1308 = vmatpush.msra.mxu0 %v205
    %1309 = vmatpush.msra.mxu0 %v199
    %1310 = vmatpush.msra.mxu0 %v193
    %1311 = vmatmul.f32.gmra.mxu0 %v1193
    %v1312 = vpop.f32.mrf.mxu0
    %v1313 = vadd.f32 %v408, %v1312
    %1314 = vdwg.mxu0
    %v1318 = vrot.slane %v1273, 5
    %v1319 = vrot.slane %v1293, 5
    %v1320 = vrot.slane %v1313, 5
    %v1321 = vrot.slane %v1273, 6
    %v1322 = vrot.slane %v1293, 6
    %v1323 = vrot.slane %v1313, 6
    %v1330 = vmul.f32 %v394, %v1318
    %v1331 = vmul.f32 %v394, %v1319
    %v1332 = vmul.f32 %v394, %v1320
    %v1333 = vmul.f32 %v401, %v1321
    %v1334 = vmul.f32 %v401, %v1322
    %v1335 = vmul.f32 %v401, %v1323
    %v1336 = vadd.f32 %v381, %v1330
    %v1337 = vadd.f32 %v382, %v1331
    %v1338 = vadd.f32 %v383, %v1332
    %v1339 = vadd.f32 %v384, %v1333
    %v1340 = vadd.f32 %v385, %v1334
    %v1341 = vadd.f32 %v386, %v1335
    %v1344 = vrot.slane %v1213, 5
    %v1345 = vrot.slane %v1233, 5
    %v1346 = vrot.slane %v1213, 6
    %v1347 = vrot.slane %v1233, 6
    %v1352 = vadd.f32 %v1336, %v1344
    %v1353 = vadd.f32 %v1337, %v1345
    %v1354 = vadd.f32 %v1339, %v1346
    %v1355 = vadd.f32 %v1340, %v1347
    %v1356 = vxor.u32 %v1352, 2147483648
    %v1357 = vxor.u32 %v1354, 2147483648
    %v1358 = vmul.f32 %v1356, 1.442695
    %v1359 = vpow.pop %v1358
    %v1360 = vmul.f32 %v1357, 1.442695
    %v1361 = vpow.pop %v1360
    %v1362 = vadd.f32 %v1359, 1.0
    %v1363 = vadd.f32 %v1361, 1.0
    %v1364 = vrcp.pop %v1362
    %v1365 = vmul.f32 %v1362, %v1364
    %v1366 = vsub.f32 1.0, %v1365
    %v1367 = vmul.f32 %v1364, %v1366
    %v1368 = vadd.f32 %v1364, %v1367
    %vm1369 = vweird.f32 %v1362
    %vm1370 = vweird.f32 %v1364
    %vm1371 = vmor %vm1369, %vm1370
    %v1372 = vsel %vm1371, %v1364, %v1368
    %v1373 = vand.u32 2147483647, %v1362
    %vm1374 = vcmp.eq.f32.partialorder %v1373, 8.507059e+37
    %v1375 = vand.u32 %v1362, 2147483648
    %v1376 = vor.u32 1.1754944e-38, %v1375
    %v1377 = vsel %vm1374, %v1376, %v1372
    %v1378 = vmul.f32 1.0, %v1377
    %v1379 = vrcp.pop %v1363
    %v1380 = vmul.f32 %v1363, %v1379
    %v1381 = vsub.f32 1.0, %v1380
    %v1382 = vmul.f32 %v1379, %v1381
    %v1383 = vadd.f32 %v1379, %v1382
    %vm1384 = vweird.f32 %v1363
    %vm1385 = vweird.f32 %v1379
    %vm1386 = vmor %vm1384, %vm1385
    %v1387 = vsel %vm1386, %v1379, %v1383
    %v1388 = vand.u32 2147483647, %v1363
    %vm1389 = vcmp.eq.f32.partialorder %v1388, 8.507059e+37
    %v1390 = vand.u32 %v1363, 2147483648
    %v1391 = vor.u32 1.1754944e-38, %v1390
    %v1392 = vsel %vm1389, %v1391, %v1387
    %v1393 = vmul.f32 1.0, %v1392
    %v1394 = vxor.u32 %v1353, 2147483648
    %v1395 = vxor.u32 %v1355, 2147483648
    %v1396 = vmul.f32 %v1394, 1.442695
    %v1397 = vpow.pop %v1396
    %v1398 = vmul.f32 %v1395, 1.442695
    %v1399 = vpow.pop %v1398
    %v1400 = vadd.f32 %v1397, 1.0
    %v1401 = vadd.f32 %v1399, 1.0
    %v1402 = vrcp.pop %v1400
    %v1403 = vmul.f32 %v1400, %v1402
    %v1404 = vsub.f32 1.0, %v1403
    %v1405 = vmul.f32 %v1402, %v1404
    %v1406 = vadd.f32 %v1402, %v1405
    %vm1407 = vweird.f32 %v1400
    %vm1408 = vweird.f32 %v1402
    %vm1409 = vmor %vm1407, %vm1408
    %v1410 = vsel %vm1409, %v1402, %v1406
    %v1411 = vand.u32 2147483647, %v1400
    %vm1412 = vcmp.eq.f32.partialorder %v1411, 8.507059e+37
    %v1413 = vand.u32 %v1400, 2147483648
    %v1414 = vor.u32 1.1754944e-38, %v1413
    %v1415 = vsel %vm1412, %v1414, %v1410
    %v1416 = vmul.f32 1.0, %v1415
    %v1417 = vrcp.pop %v1401
    %v1418 = vmul.f32 %v1401, %v1417
    %v1419 = vsub.f32 1.0, %v1418
    %v1420 = vmul.f32 %v1417, %v1419
    %v1421 = vadd.f32 %v1417, %v1420
    %vm1422 = vweird.f32 %v1401
    %vm1423 = vweird.f32 %v1417
    %vm1424 = vmor %vm1422, %vm1423
    %v1425 = vsel %vm1424, %v1417, %v1421
    %v1426 = vand.u32 2147483647, %v1401
    %vm1427 = vcmp.eq.f32.partialorder %v1426, 8.507059e+37
    %v1428 = vand.u32 %v1401, 2147483648
    %v1429 = vor.u32 1.1754944e-38, %v1428
    %v1430 = vsel %vm1427, %v1429, %v1425
    %v1431 = vmul.f32 1.0, %v1430
    %v1433 = vrot.slane %v1253, 5
    %v1434 = vrot.slane %v1253, 6
    %v1437 = vmul.f32 %v1378, %v1433
    %v1438 = vmul.f32 %v1393, %v1434
    %v1439 = vadd.f32 %v1338, %v1437
    %v1440 = vadd.f32 %v1341, %v1438
    %v1441 = vtanh.pop %v1439
    %v1442 = vtanh.pop %v1440
    %v1443 = vsub.f32 1.0, %v1416
    %v1444 = vsub.f32 1.0, %v1431
    %v1445 = vmul.f32 %v1443, %v1441
    %v1446 = vmul.f32 %v1444, %v1442
    %v1447 = vrot.slane %v1187, 7
    %v1448 = vrot.slane %v1188, 7
    %v1451 = vmul.f32 %v1416, %v1447
    %v1452 = vmul.f32 %v1431, %v1448
    %v1453 = vadd.f32 %v1445, %v1451
    %v1454 = vadd.f32 %v1446, %v1452
    %v1457 = vrot.slane %v1453, 3
    %v1458 = vrot.slane %v1454, 2
    %v1459 = vsel %vm668, %v1458, %v1457
    %1461 = vmatpush.msra.mxu0 %v278
    %1462 = vmatpush.msra.mxu0 %v272
    %1463 = vmatpush.msra.mxu0 %v266
    %1464 = vmatpush.msra.mxu0 %v260
    %1465 = vmatpush.msra.mxu0 %v254
    %1466 = vmatpush.msra.mxu0 %v248
    %1467 = vmatpush.msra.mxu0 %v242
    %1468 = vmatpush.msra.mxu0 %v236
    %1469 = vmatpush.msra.mxu0 %v230
    %1470 = vmatpush.msra.mxu0 %v224
    %1471 = vmatpush.msra.mxu0 %v218
    %1472 = vmatpush.msra.mxu0 %v212
    %1473 = vmatpush.msra.mxu0 %v206
    %1474 = vmatpush.msra.mxu0 %v200
    %1475 = vmatpush.msra.mxu0 %v194
    %1476 = vmatpush.msra.mxu0 %v188
    %1477 = vmatmul.f32.gmra.mxu0 %v1459
    %v1478 = vpop.f32.mrf.mxu0
    %v1479 = vadd.f32 %v403, %v1478
    %1480 = vdwg.mxu0
    %1481 = vmatpush.msra.mxu0 %v279
    %1482 = vmatpush.msra.mxu0 %v273
    %1483 = vmatpush.msra.mxu0 %v267
    %1484 = vmatpush.msra.mxu0 %v261
    %1485 = vmatpush.msra.mxu0 %v255
    %1486 = vmatpush.msra.mxu0 %v249
    %1487 = vmatpush.msra.mxu0 %v243
    %1488 = vmatpush.msra.mxu0 %v237
    %1489 = vmatpush.msra.mxu0 %v231
    %1490 = vmatpush.msra.mxu0 %v225
    %1491 = vmatpush.msra.mxu0 %v219
    %1492 = vmatpush.msra.mxu0 %v213
    %1493 = vmatpush.msra.mxu0 %v207
    %1494 = vmatpush.msra.mxu0 %v201
    %1495 = vmatpush.msra.mxu0 %v195
    %1496 = vmatpush.msra.mxu0 %v189
    %1497 = vmatmul.f32.gmra.mxu0 %v1459
    %v1498 = vpop.f32.mrf.mxu0
    %v1499 = vadd.f32 %v404, %v1498
    %1500 = vdwg.mxu0
    %1501 = vmatpush.msra.mxu0 %v280
    %1502 = vmatpush.msra.mxu0 %v274
    %1503 = vmatpush.msra.mxu0 %v268
    %1504 = vmatpush.msra.mxu0 %v262
    %1505 = vmatpush.msra.mxu0 %v256
    %1506 = vmatpush.msra.mxu0 %v250
    %1507 = vmatpush.msra.mxu0 %v244
    %1508 = vmatpush.msra.mxu0 %v238
    %1509 = vmatpush.msra.mxu0 %v232
    %1510 = vmatpush.msra.mxu0 %v226
    %1511 = vmatpush.msra.mxu0 %v220
    %1512 = vmatpush.msra.mxu0 %v214
    %1513 = vmatpush.msra.mxu0 %v208
    %1514 = vmatpush.msra.mxu0 %v202
    %1515 = vmatpush.msra.mxu0 %v196
    %1516 = vmatpush.msra.mxu0 %v190
    %1517 = vmatmul.f32.gmra.mxu0 %v1459
    %v1518 = vpop.f32.mrf.mxu0
    %v1519 = vadd.f32 %v405, %v1518
    %1520 = vdwg.mxu0
    %1521 = vmatpush.msra.mxu0 %v281
    %1522 = vmatpush.msra.mxu0 %v275
    %1523 = vmatpush.msra.mxu0 %v269
    %1524 = vmatpush.msra.mxu0 %v263
    %1525 = vmatpush.msra.mxu0 %v257
    %1526 = vmatpush.msra.mxu0 %v251
    %1527 = vmatpush.msra.mxu0 %v245
    %1528 = vmatpush.msra.mxu0 %v239
    %1529 = vmatpush.msra.mxu0 %v233
    %1530 = vmatpush.msra.mxu0 %v227
    %1531 = vmatpush.msra.mxu0 %v221
    %1532 = vmatpush.msra.mxu0 %v215
    %1533 = vmatpush.msra.mxu0 %v209
    %1534 = vmatpush.msra.mxu0 %v203
    %1535 = vmatpush.msra.mxu0 %v197
    %1536 = vmatpush.msra.mxu0 %v191
    %1537 = vmatmul.f32.gmra.mxu0 %v1459
    %v1538 = vpop.f32.mrf.mxu0
    %v1539 = vadd.f32 %v406, %v1538
    %1540 = vdwg.mxu0
    %1541 = vmatpush.msra.mxu0 %v282
    %1542 = vmatpush.msra.mxu0 %v276
    %1543 = vmatpush.msra.mxu0 %v270
    %1544 = vmatpush.msra.mxu0 %v264
    %1545 = vmatpush.msra.mxu0 %v258
    %1546 = vmatpush.msra.mxu0 %v252
    %1547 = vmatpush.msra.mxu0 %v246
    %1548 = vmatpush.msra.mxu0 %v240
    %1549 = vmatpush.msra.mxu0 %v234
    %1550 = vmatpush.msra.mxu0 %v228
    %1551 = vmatpush.msra.mxu0 %v222
    %1552 = vmatpush.msra.mxu0 %v216
    %1553 = vmatpush.msra.mxu0 %v210
    %1554 = vmatpush.msra.mxu0 %v204
    %1555 = vmatpush.msra.mxu0 %v198
    %1556 = vmatpush.msra.mxu0 %v192
    %1557 = vmatmul.f32.gmra.mxu0 %v1459
    %v1558 = vpop.f32.mrf.mxu0
    %v1559 = vadd.f32 %v407, %v1558
    %1560 = vdwg.mxu0
    %1561 = vmatpush.msra.mxu0 %v283
    %1562 = vmatpush.msra.mxu0 %v277
    %1563 = vmatpush.msra.mxu0 %v271
    %1564 = vmatpush.msra.mxu0 %v265
    %1565 = vmatpush.msra.mxu0 %v259
    %1566 = vmatpush.msra.mxu0 %v253
    %1567 = vmatpush.msra.mxu0 %v247
    %1568 = vmatpush.msra.mxu0 %v241
    %1569 = vmatpush.msra.mxu0 %v235
    %1570 = vmatpush.msra.mxu0 %v229
    %1571 = vmatpush.msra.mxu0 %v223
    %1572 = vmatpush.msra.mxu0 %v217
    %1573 = vmatpush.msra.mxu0 %v211
    %1574 = vmatpush.msra.mxu0 %v205
    %1575 = vmatpush.msra.mxu0 %v199
    %1576 = vmatpush.msra.mxu0 %v193
    %1577 = vmatmul.f32.gmra.mxu0 %v1459
    %v1578 = vpop.f32.mrf.mxu0
    %v1579 = vadd.f32 %v408, %v1578
    %1580 = vdwg.mxu0
    %v1584 = vrot.slane %v1539, 4
    %v1585 = vrot.slane %v1559, 4
    %v1586 = vrot.slane %v1579, 4
    %v1587 = vrot.slane %v1539, 5
    %v1588 = vrot.slane %v1559, 5
    %v1589 = vrot.slane %v1579, 5
    %v1596 = vmul.f32 %v394, %v1584
    %v1597 = vmul.f32 %v394, %v1585
    %v1598 = vmul.f32 %v394, %v1586
    %v1599 = vmul.f32 %v401, %v1587
    %v1600 = vmul.f32 %v401, %v1588
    %v1601 = vmul.f32 %v401, %v1589
    %v1602 = vadd.f32 %v381, %v1596
    %v1603 = vadd.f32 %v382, %v1597
    %v1604 = vadd.f32 %v383, %v1598
    %v1605 = vadd.f32 %v384, %v1599
    %v1606 = vadd.f32 %v385, %v1600
    %v1607 = vadd.f32 %v386, %v1601
    %v1610 = vrot.slane %v1479, 4
    %v1611 = vrot.slane %v1499, 4
    %v1612 = vrot.slane %v1479, 5
    %v1613 = vrot.slane %v1499, 5
    %v1618 = vadd.f32 %v1602, %v1610
    %v1619 = vadd.f32 %v1603, %v1611
    %v1620 = vadd.f32 %v1605, %v1612
    %v1621 = vadd.f32 %v1606, %v1613
    %v1622 = vxor.u32 %v1618, 2147483648
    %v1623 = vxor.u32 %v1620, 2147483648
    %v1624 = vmul.f32 %v1622, 1.442695
    %v1625 = vpow.pop %v1624
    %v1626 = vmul.f32 %v1623, 1.442695
    %v1627 = vpow.pop %v1626
    %v1628 = vadd.f32 %v1625, 1.0
    %v1629 = vadd.f32 %v1627, 1.0
    %v1630 = vrcp.pop %v1628
    %v1631 = vmul.f32 %v1628, %v1630
    %v1632 = vsub.f32 1.0, %v1631
    %v1633 = vmul.f32 %v1630, %v1632
    %v1634 = vadd.f32 %v1630, %v1633
    %vm1635 = vweird.f32 %v1628
    %vm1636 = vweird.f32 %v1630
    %vm1637 = vmor %vm1635, %vm1636
    %v1638 = vsel %vm1637, %v1630, %v1634
    %v1639 = vand.u32 2147483647, %v1628
    %vm1640 = vcmp.eq.f32.partialorder %v1639, 8.507059e+37
    %v1641 = vand.u32 %v1628, 2147483648
    %v1642 = vor.u32 1.1754944e-38, %v1641
    %v1643 = vsel %vm1640, %v1642, %v1638
    %v1644 = vmul.f32 1.0, %v1643
    %v1645 = vrcp.pop %v1629
    %v1646 = vmul.f32 %v1629, %v1645
    %v1647 = vsub.f32 1.0, %v1646
    %v1648 = vmul.f32 %v1645, %v1647
    %v1649 = vadd.f32 %v1645, %v1648
    %vm1650 = vweird.f32 %v1629
    %vm1651 = vweird.f32 %v1645
    %vm1652 = vmor %vm1650, %vm1651
    %v1653 = vsel %vm1652, %v1645, %v1649
    %v1654 = vand.u32 2147483647, %v1629
    %vm1655 = vcmp.eq.f32.partialorder %v1654, 8.507059e+37
    %v1656 = vand.u32 %v1629, 2147483648
    %v1657 = vor.u32 1.1754944e-38, %v1656
    %v1658 = vsel %vm1655, %v1657, %v1653
    %v1659 = vmul.f32 1.0, %v1658
    %v1660 = vxor.u32 %v1619, 2147483648
    %v1661 = vxor.u32 %v1621, 2147483648
    %v1662 = vmul.f32 %v1660, 1.442695
    %v1663 = vpow.pop %v1662
    %v1664 = vmul.f32 %v1661, 1.442695
    %v1665 = vpow.pop %v1664
    %v1666 = vadd.f32 %v1663, 1.0
    %v1667 = vadd.f32 %v1665, 1.0
    %v1668 = vrcp.pop %v1666
    %v1669 = vmul.f32 %v1666, %v1668
    %v1670 = vsub.f32 1.0, %v1669
    %v1671 = vmul.f32 %v1668, %v1670
    %v1672 = vadd.f32 %v1668, %v1671
    %vm1673 = vweird.f32 %v1666
    %vm1674 = vweird.f32 %v1668
    %vm1675 = vmor %vm1673, %vm1674
    %v1676 = vsel %vm1675, %v1668, %v1672
    %v1677 = vand.u32 2147483647, %v1666
    %vm1678 = vcmp.eq.f32.partialorder %v1677, 8.507059e+37
    %v1679 = vand.u32 %v1666, 2147483648
    %v1680 = vor.u32 1.1754944e-38, %v1679
    %v1681 = vsel %vm1678, %v1680, %v1676
    %v1682 = vmul.f32 1.0, %v1681
    %v1683 = vrcp.pop %v1667
    %v1684 = vmul.f32 %v1667, %v1683
    %v1685 = vsub.f32 1.0, %v1684
    %v1686 = vmul.f32 %v1683, %v1685
    %v1687 = vadd.f32 %v1683, %v1686
    %vm1688 = vweird.f32 %v1667
    %vm1689 = vweird.f32 %v1683
    %vm1690 = vmor %vm1688, %vm1689
    %v1691 = vsel %vm1690, %v1683, %v1687
    %v1692 = vand.u32 2147483647, %v1667
    %vm1693 = vcmp.eq.f32.partialorder %v1692, 8.507059e+37
    %v1694 = vand.u32 %v1667, 2147483648
    %v1695 = vor.u32 1.1754944e-38, %v1694
    %v1696 = vsel %vm1693, %v1695, %v1691
    %v1697 = vmul.f32 1.0, %v1696
    %v1699 = vrot.slane %v1519, 4
    %v1700 = vrot.slane %v1519, 5
    %v1703 = vmul.f32 %v1644, %v1699
    %v1704 = vmul.f32 %v1659, %v1700
    %v1705 = vadd.f32 %v1604, %v1703
    %v1706 = vadd.f32 %v1607, %v1704
    %v1707 = vtanh.pop %v1705
    %v1708 = vtanh.pop %v1706
    %v1709 = vsub.f32 1.0, %v1682
    %v1710 = vsub.f32 1.0, %v1697
    %v1711 = vmul.f32 %v1709, %v1707
    %v1712 = vmul.f32 %v1710, %v1708
    %v1713 = vrot.slane %v1453, 7
    %v1714 = vrot.slane %v1454, 7
    %v1717 = vmul.f32 %v1682, %v1713
    %v1718 = vmul.f32 %v1697, %v1714
    %v1719 = vadd.f32 %v1711, %v1717
    %v1720 = vadd.f32 %v1712, %v1718
    %v1723 = vrot.slane %v1719, 4
    %v1724 = vrot.slane %v1720, 3
    %v1725 = vsel %vm668, %v1724, %v1723
    %1727 = vmatpush.msra.mxu0 %v278
    %1728 = vmatpush.msra.mxu0 %v272
    %1729 = vmatpush.msra.mxu0 %v266
    %1730 = vmatpush.msra.mxu0 %v260
    %1731 = vmatpush.msra.mxu0 %v254
    %1732 = vmatpush.msra.mxu0 %v248
    %1733 = vmatpush.msra.mxu0 %v242
    %1734 = vmatpush.msra.mxu0 %v236
    %1735 = vmatpush.msra.mxu0 %v230
    %1736 = vmatpush.msra.mxu0 %v224
    %1737 = vmatpush.msra.mxu0 %v218
    %1738 = vmatpush.msra.mxu0 %v212
    %1739 = vmatpush.msra.mxu0 %v206
    %1740 = vmatpush.msra.mxu0 %v200
    %1741 = vmatpush.msra.mxu0 %v194
    %1742 = vmatpush.msra.mxu0 %v188
    %1743 = vmatmul.f32.gmra.mxu0 %v1725
    %v1744 = vpop.f32.mrf.mxu0
    %v1745 = vadd.f32 %v403, %v1744
    %1746 = vdwg.mxu0
    %1747 = vmatpush.msra.mxu0 %v279
    %1748 = vmatpush.msra.mxu0 %v273
    %1749 = vmatpush.msra.mxu0 %v267
    %1750 = vmatpush.msra.mxu0 %v261
    %1751 = vmatpush.msra.mxu0 %v255
    %1752 = vmatpush.msra.mxu0 %v249
    %1753 = vmatpush.msra.mxu0 %v243
    %1754 = vmatpush.msra.mxu0 %v237
    %1755 = vmatpush.msra.mxu0 %v231
    %1756 = vmatpush.msra.mxu0 %v225
    %1757 = vmatpush.msra.mxu0 %v219
    %1758 = vmatpush.msra.mxu0 %v213
    %1759 = vmatpush.msra.mxu0 %v207
    %1760 = vmatpush.msra.mxu0 %v201
    %1761 = vmatpush.msra.mxu0 %v195
    %1762 = vmatpush.msra.mxu0 %v189
    %1763 = vmatmul.f32.gmra.mxu0 %v1725
    %v1764 = vpop.f32.mrf.mxu0
    %v1765 = vadd.f32 %v404, %v1764
    %1766 = vdwg.mxu0
    %1767 = vmatpush.msra.mxu0 %v280
    %1768 = vmatpush.msra.mxu0 %v274
    %1769 = vmatpush.msra.mxu0 %v268
    %1770 = vmatpush.msra.mxu0 %v262
    %1771 = vmatpush.msra.mxu0 %v256
    %1772 = vmatpush.msra.mxu0 %v250
    %1773 = vmatpush.msra.mxu0 %v244
    %1774 = vmatpush.msra.mxu0 %v238
    %1775 = vmatpush.msra.mxu0 %v232
    %1776 = vmatpush.msra.mxu0 %v226
    %1777 = vmatpush.msra.mxu0 %v220
    %1778 = vmatpush.msra.mxu0 %v214
    %1779 = vmatpush.msra.mxu0 %v208
    %1780 = vmatpush.msra.mxu0 %v202
    %1781 = vmatpush.msra.mxu0 %v196
    %1782 = vmatpush.msra.mxu0 %v190
    %1783 = vmatmul.f32.gmra.mxu0 %v1725
    %v1784 = vpop.f32.mrf.mxu0
    %v1785 = vadd.f32 %v405, %v1784
    %1786 = vdwg.mxu0
    %1787 = vmatpush.msra.mxu0 %v281
    %1788 = vmatpush.msra.mxu0 %v275
    %1789 = vmatpush.msra.mxu0 %v269
    %1790 = vmatpush.msra.mxu0 %v263
    %1791 = vmatpush.msra.mxu0 %v257
    %1792 = vmatpush.msra.mxu0 %v251
    %1793 = vmatpush.msra.mxu0 %v245
    %1794 = vmatpush.msra.mxu0 %v239
    %1795 = vmatpush.msra.mxu0 %v233
    %1796 = vmatpush.msra.mxu0 %v227
    %1797 = vmatpush.msra.mxu0 %v221
    %1798 = vmatpush.msra.mxu0 %v215
    %1799 = vmatpush.msra.mxu0 %v209
    %1800 = vmatpush.msra.mxu0 %v203
    %1801 = vmatpush.msra.mxu0 %v197
    %1802 = vmatpush.msra.mxu0 %v191
    %1803 = vmatmul.f32.gmra.mxu0 %v1725
    %v1804 = vpop.f32.mrf.mxu0
    %v1805 = vadd.f32 %v406, %v1804
    %1806 = vdwg.mxu0
    %1807 = vmatpush.msra.mxu0 %v282
    %1808 = vmatpush.msra.mxu0 %v276
    %1809 = vmatpush.msra.mxu0 %v270
    %1810 = vmatpush.msra.mxu0 %v264
    %1811 = vmatpush.msra.mxu0 %v258
    %1812 = vmatpush.msra.mxu0 %v252
    %1813 = vmatpush.msra.mxu0 %v246
    %1814 = vmatpush.msra.mxu0 %v240
    %1815 = vmatpush.msra.mxu0 %v234
    %1816 = vmatpush.msra.mxu0 %v228
    %1817 = vmatpush.msra.mxu0 %v222
    %1818 = vmatpush.msra.mxu0 %v216
    %1819 = vmatpush.msra.mxu0 %v210
    %1820 = vmatpush.msra.mxu0 %v204
    %1821 = vmatpush.msra.mxu0 %v198
    %1822 = vmatpush.msra.mxu0 %v192
    %1823 = vmatmul.f32.gmra.mxu0 %v1725
    %v1824 = vpop.f32.mrf.mxu0
    %v1825 = vadd.f32 %v407, %v1824
    %1826 = vdwg.mxu0
    %1827 = vmatpush.msra.mxu0 %v283
    %1828 = vmatpush.msra.mxu0 %v277
    %1829 = vmatpush.msra.mxu0 %v271
    %1830 = vmatpush.msra.mxu0 %v265
    %1831 = vmatpush.msra.mxu0 %v259
    %1832 = vmatpush.msra.mxu0 %v253
    %1833 = vmatpush.msra.mxu0 %v247
    %1834 = vmatpush.msra.mxu0 %v241
    %1835 = vmatpush.msra.mxu0 %v235
    %1836 = vmatpush.msra.mxu0 %v229
    %1837 = vmatpush.msra.mxu0 %v223
    %1838 = vmatpush.msra.mxu0 %v217
    %1839 = vmatpush.msra.mxu0 %v211
    %1840 = vmatpush.msra.mxu0 %v205
    %1841 = vmatpush.msra.mxu0 %v199
    %1842 = vmatpush.msra.mxu0 %v193
    %1843 = vmatmul.f32.gmra.mxu0 %v1725
    %v1844 = vpop.f32.mrf.mxu0
    %v1845 = vadd.f32 %v408, %v1844
    %1846 = vdwg.mxu0
    %v1850 = vrot.slane %v1805, 3
    %v1851 = vrot.slane %v1825, 3
    %v1852 = vrot.slane %v1845, 3
    %v1853 = vrot.slane %v1805, 4
    %v1854 = vrot.slane %v1825, 4
    %v1855 = vrot.slane %v1845, 4
    %v1862 = vmul.f32 %v394, %v1850
    %v1863 = vmul.f32 %v394, %v1851
    %v1864 = vmul.f32 %v394, %v1852
    %v1865 = vmul.f32 %v401, %v1853
    %v1866 = vmul.f32 %v401, %v1854
    %v1867 = vmul.f32 %v401, %v1855
    %v1868 = vadd.f32 %v381, %v1862
    %v1869 = vadd.f32 %v382, %v1863
    %v1870 = vadd.f32 %v383, %v1864
    %v1871 = vadd.f32 %v384, %v1865
    %v1872 = vadd.f32 %v385, %v1866
    %v1873 = vadd.f32 %v386, %v1867
    %v1876 = vrot.slane %v1745, 3
    %v1877 = vrot.slane %v1765, 3
    %v1878 = vrot.slane %v1745, 4
    %v1879 = vrot.slane %v1765, 4
    %v1884 = vadd.f32 %v1868, %v1876
    %v1885 = vadd.f32 %v1869, %v1877
    %v1886 = vadd.f32 %v1871, %v1878
    %v1887 = vadd.f32 %v1872, %v1879
    %v1888 = vxor.u32 %v1884, 2147483648
    %v1889 = vxor.u32 %v1886, 2147483648
    %v1890 = vmul.f32 %v1888, 1.442695
    %v1891 = vpow.pop %v1890
    %v1892 = vmul.f32 %v1889, 1.442695
    %v1893 = vpow.pop %v1892
    %v1894 = vadd.f32 %v1891, 1.0
    %v1895 = vadd.f32 %v1893, 1.0
    %v1896 = vrcp.pop %v1894
    %v1897 = vmul.f32 %v1894, %v1896
    %v1898 = vsub.f32 1.0, %v1897
    %v1899 = vmul.f32 %v1896, %v1898
    %v1900 = vadd.f32 %v1896, %v1899
    %vm1901 = vweird.f32 %v1894
    %vm1902 = vweird.f32 %v1896
    %vm1903 = vmor %vm1901, %vm1902
    %v1904 = vsel %vm1903, %v1896, %v1900
    %v1905 = vand.u32 2147483647, %v1894
    %vm1906 = vcmp.eq.f32.partialorder %v1905, 8.507059e+37
    %v1907 = vand.u32 %v1894, 2147483648
    %v1908 = vor.u32 1.1754944e-38, %v1907
    %v1909 = vsel %vm1906, %v1908, %v1904
    %v1910 = vmul.f32 1.0, %v1909
    %v1911 = vrcp.pop %v1895
    %v1912 = vmul.f32 %v1895, %v1911
    %v1913 = vsub.f32 1.0, %v1912
    %v1914 = vmul.f32 %v1911, %v1913
    %v1915 = vadd.f32 %v1911, %v1914
    %vm1916 = vweird.f32 %v1895
    %vm1917 = vweird.f32 %v1911
    %vm1918 = vmor %vm1916, %vm1917
    %v1919 = vsel %vm1918, %v1911, %v1915
    %v1920 = vand.u32 2147483647, %v1895
    %vm1921 = vcmp.eq.f32.partialorder %v1920, 8.507059e+37
    %v1922 = vand.u32 %v1895, 2147483648
    %v1923 = vor.u32 1.1754944e-38, %v1922
    %v1924 = vsel %vm1921, %v1923, %v1919
    %v1925 = vmul.f32 1.0, %v1924
    %v1926 = vxor.u32 %v1885, 2147483648
    %v1927 = vxor.u32 %v1887, 2147483648
    %v1928 = vmul.f32 %v1926, 1.442695
    %v1929 = vpow.pop %v1928
    %v1930 = vmul.f32 %v1927, 1.442695
    %v1931 = vpow.pop %v1930
    %v1932 = vadd.f32 %v1929, 1.0
    %v1933 = vadd.f32 %v1931, 1.0
    %v1934 = vrcp.pop %v1932
    %v1935 = vmul.f32 %v1932, %v1934
    %v1936 = vsub.f32 1.0, %v1935
    %v1937 = vmul.f32 %v1934, %v1936
    %v1938 = vadd.f32 %v1934, %v1937
    %vm1939 = vweird.f32 %v1932
    %vm1940 = vweird.f32 %v1934
    %vm1941 = vmor %vm1939, %vm1940
    %v1942 = vsel %vm1941, %v1934, %v1938
    %v1943 = vand.u32 2147483647, %v1932
    %vm1944 = vcmp.eq.f32.partialorder %v1943, 8.507059e+37
    %v1945 = vand.u32 %v1932, 2147483648
    %v1946 = vor.u32 1.1754944e-38, %v1945
    %v1947 = vsel %vm1944, %v1946, %v1942
    %v1948 = vmul.f32 1.0, %v1947
    %v1949 = vrcp.pop %v1933
    %v1950 = vmul.f32 %v1933, %v1949
    %v1951 = vsub.f32 1.0, %v1950
    %v1952 = vmul.f32 %v1949, %v1951
    %v1953 = vadd.f32 %v1949, %v1952
    %vm1954 = vweird.f32 %v1933
    %vm1955 = vweird.f32 %v1949
    %vm1956 = vmor %vm1954, %vm1955
    %v1957 = vsel %vm1956, %v1949, %v1953
    %v1958 = vand.u32 2147483647, %v1933
    %vm1959 = vcmp.eq.f32.partialorder %v1958, 8.507059e+37
    %v1960 = vand.u32 %v1933, 2147483648
    %v1961 = vor.u32 1.1754944e-38, %v1960
    %v1962 = vsel %vm1959, %v1961, %v1957
    %v1963 = vmul.f32 1.0, %v1962
    %v1965 = vrot.slane %v1785, 3
    %v1966 = vrot.slane %v1785, 4
    %v1969 = vmul.f32 %v1910, %v1965
    %v1970 = vmul.f32 %v1925, %v1966
    %v1971 = vadd.f32 %v1870, %v1969
    %v1972 = vadd.f32 %v1873, %v1970
    %v1973 = vtanh.pop %v1971
    %v1974 = vtanh.pop %v1972
    %v1975 = vsub.f32 1.0, %v1948
    %v1976 = vsub.f32 1.0, %v1963
    %v1977 = vmul.f32 %v1975, %v1973
    %v1978 = vmul.f32 %v1976, %v1974
    %v1979 = vrot.slane %v1719, 7
    %v1980 = vrot.slane %v1720, 7
    %v1983 = vmul.f32 %v1948, %v1979
    %v1984 = vmul.f32 %v1963, %v1980
    %v1985 = vadd.f32 %v1977, %v1983
    %v1986 = vadd.f32 %v1978, %v1984
    %v1989 = vrot.slane %v1985, 5
    %v1990 = vrot.slane %v1986, 4
    %v1991 = vsel %vm668, %v1990, %v1989
    %1993 = vmatpush.msra.mxu0 %v278
    %1994 = vmatpush.msra.mxu0 %v272
    %1995 = vmatpush.msra.mxu0 %v266
    %1996 = vmatpush.msra.mxu0 %v260
    %1997 = vmatpush.msra.mxu0 %v254
    %1998 = vmatpush.msra.mxu0 %v248
    %1999 = vmatpush.msra.mxu0 %v242
    %2000 = vmatpush.msra.mxu0 %v236
    %2001 = vmatpush.msra.mxu0 %v230
    %2002 = vmatpush.msra.mxu0 %v224
    %2003 = vmatpush.msra.mxu0 %v218
    %2004 = vmatpush.msra.mxu0 %v212
    %2005 = vmatpush.msra.mxu0 %v206
    %2006 = vmatpush.msra.mxu0 %v200
    %2007 = vmatpush.msra.mxu0 %v194
    %2008 = vmatpush.msra.mxu0 %v188
    %2009 = vmatmul.f32.gmra.mxu0 %v1991
    %v2010 = vpop.f32.mrf.mxu0
    %v2011 = vadd.f32 %v403, %v2010
    %2012 = vdwg.mxu0
    %2013 = vmatpush.msra.mxu0 %v279
    %2014 = vmatpush.msra.mxu0 %v273
    %2015 = vmatpush.msra.mxu0 %v267
    %2016 = vmatpush.msra.mxu0 %v261
    %2017 = vmatpush.msra.mxu0 %v255
    %2018 = vmatpush.msra.mxu0 %v249
    %2019 = vmatpush.msra.mxu0 %v243
    %2020 = vmatpush.msra.mxu0 %v237
    %2021 = vmatpush.msra.mxu0 %v231
    %2022 = vmatpush.msra.mxu0 %v225
    %2023 = vmatpush.msra.mxu0 %v219
    %2024 = vmatpush.msra.mxu0 %v213
    %2025 = vmatpush.msra.mxu0 %v207
    %2026 = vmatpush.msra.mxu0 %v201
    %2027 = vmatpush.msra.mxu0 %v195
    %2028 = vmatpush.msra.mxu0 %v189
    %2029 = vmatmul.f32.gmra.mxu0 %v1991
    %v2030 = vpop.f32.mrf.mxu0
    %v2031 = vadd.f32 %v404, %v2030
    %2032 = vdwg.mxu0
    %2033 = vmatpush.msra.mxu0 %v280
    %2034 = vmatpush.msra.mxu0 %v274
    %2035 = vmatpush.msra.mxu0 %v268
    %2036 = vmatpush.msra.mxu0 %v262
    %2037 = vmatpush.msra.mxu0 %v256
    %2038 = vmatpush.msra.mxu0 %v250
    %2039 = vmatpush.msra.mxu0 %v244
    %2040 = vmatpush.msra.mxu0 %v238
    %2041 = vmatpush.msra.mxu0 %v232
    %2042 = vmatpush.msra.mxu0 %v226
    %2043 = vmatpush.msra.mxu0 %v220
    %2044 = vmatpush.msra.mxu0 %v214
    %2045 = vmatpush.msra.mxu0 %v208
    %2046 = vmatpush.msra.mxu0 %v202
    %2047 = vmatpush.msra.mxu0 %v196
    %2048 = vmatpush.msra.mxu0 %v190
    %2049 = vmatmul.f32.gmra.mxu0 %v1991
    %v2050 = vpop.f32.mrf.mxu0
    %v2051 = vadd.f32 %v405, %v2050
    %2052 = vdwg.mxu0
    %2053 = vmatpush.msra.mxu0 %v281
    %2054 = vmatpush.msra.mxu0 %v275
    %2055 = vmatpush.msra.mxu0 %v269
    %2056 = vmatpush.msra.mxu0 %v263
    %2057 = vmatpush.msra.mxu0 %v257
    %2058 = vmatpush.msra.mxu0 %v251
    %2059 = vmatpush.msra.mxu0 %v245
    %2060 = vmatpush.msra.mxu0 %v239
    %2061 = vmatpush.msra.mxu0 %v233
    %2062 = vmatpush.msra.mxu0 %v227
    %2063 = vmatpush.msra.mxu0 %v221
    %2064 = vmatpush.msra.mxu0 %v215
    %2065 = vmatpush.msra.mxu0 %v209
    %2066 = vmatpush.msra.mxu0 %v203
    %2067 = vmatpush.msra.mxu0 %v197
    %2068 = vmatpush.msra.mxu0 %v191
    %2069 = vmatmul.f32.gmra.mxu0 %v1991
    %v2070 = vpop.f32.mrf.mxu0
    %v2071 = vadd.f32 %v406, %v2070
    %2072 = vdwg.mxu0
    %2073 = vmatpush.msra.mxu0 %v282
    %2074 = vmatpush.msra.mxu0 %v276
    %2075 = vmatpush.msra.mxu0 %v270
    %2076 = vmatpush.msra.mxu0 %v264
    %2077 = vmatpush.msra.mxu0 %v258
    %2078 = vmatpush.msra.mxu0 %v252
    %2079 = vmatpush.msra.mxu0 %v246
    %2080 = vmatpush.msra.mxu0 %v240
    %2081 = vmatpush.msra.mxu0 %v234
    %2082 = vmatpush.msra.mxu0 %v228
    %2083 = vmatpush.msra.mxu0 %v222
    %2084 = vmatpush.msra.mxu0 %v216
    %2085 = vmatpush.msra.mxu0 %v210
    %2086 = vmatpush.msra.mxu0 %v204
    %2087 = vmatpush.msra.mxu0 %v198
    %2088 = vmatpush.msra.mxu0 %v192
    %2089 = vmatmul.f32.gmra.mxu0 %v1991
    %v2090 = vpop.f32.mrf.mxu0
    %v2091 = vadd.f32 %v407, %v2090
    %2092 = vdwg.mxu0
    %2093 = vmatpush.msra.mxu0 %v283
    %2094 = vmatpush.msra.mxu0 %v277
    %2095 = vmatpush.msra.mxu0 %v271
    %2096 = vmatpush.msra.mxu0 %v265
    %2097 = vmatpush.msra.mxu0 %v259
    %2098 = vmatpush.msra.mxu0 %v253
    %2099 = vmatpush.msra.mxu0 %v247
    %2100 = vmatpush.msra.mxu0 %v241
    %2101 = vmatpush.msra.mxu0 %v235
    %2102 = vmatpush.msra.mxu0 %v229
    %2103 = vmatpush.msra.mxu0 %v223
    %2104 = vmatpush.msra.mxu0 %v217
    %2105 = vmatpush.msra.mxu0 %v211
    %2106 = vmatpush.msra.mxu0 %v205
    %2107 = vmatpush.msra.mxu0 %v199
    %2108 = vmatpush.msra.mxu0 %v193
    %2109 = vmatmul.f32.gmra.mxu0 %v1991
    %v2110 = vpop.f32.mrf.mxu0
    %v2111 = vadd.f32 %v408, %v2110
    %2112 = vdwg.mxu0
    %v2116 = vrot.slane %v2071, 2
    %v2117 = vrot.slane %v2091, 2
    %v2118 = vrot.slane %v2111, 2
    %v2119 = vrot.slane %v2071, 3
    %v2120 = vrot.slane %v2091, 3
    %v2121 = vrot.slane %v2111, 3
    %v2128 = vmul.f32 %v394, %v2116
    %v2129 = vmul.f32 %v394, %v2117
    %v2130 = vmul.f32 %v394, %v2118
    %v2131 = vmul.f32 %v401, %v2119
    %v2132 = vmul.f32 %v401, %v2120
    %v2133 = vmul.f32 %v401, %v2121
    %v2134 = vadd.f32 %v381, %v2128
    %v2135 = vadd.f32 %v382, %v2129
    %v2136 = vadd.f32 %v383, %v2130
    %v2137 = vadd.f32 %v384, %v2131
    %v2138 = vadd.f32 %v385, %v2132
    %v2139 = vadd.f32 %v386, %v2133
    %v2142 = vrot.slane %v2011, 2
    %v2143 = vrot.slane %v2031, 2
    %v2144 = vrot.slane %v2011, 3
    %v2145 = vrot.slane %v2031, 3
    %v2150 = vadd.f32 %v2134, %v2142
    %v2151 = vadd.f32 %v2135, %v2143
    %v2152 = vadd.f32 %v2137, %v2144
    %v2153 = vadd.f32 %v2138, %v2145
    %v2154 = vxor.u32 %v2150, 2147483648
    %v2155 = vxor.u32 %v2152, 2147483648
    %v2156 = vmul.f32 %v2154, 1.442695
    %v2157 = vpow.pop %v2156
    %v2158 = vmul.f32 %v2155, 1.442695
    %v2159 = vpow.pop %v2158
    %v2160 = vadd.f32 %v2157, 1.0
    %v2161 = vadd.f32 %v2159, 1.0
    %v2162 = vrcp.pop %v2160
    %v2163 = vmul.f32 %v2160, %v2162
    %v2164 = vsub.f32 1.0, %v2163
    %v2165 = vmul.f32 %v2162, %v2164
    %v2166 = vadd.f32 %v2162, %v2165
    %vm2167 = vweird.f32 %v2160
    %vm2168 = vweird.f32 %v2162
    %vm2169 = vmor %vm2167, %vm2168
    %v2170 = vsel %vm2169, %v2162, %v2166
    %v2171 = vand.u32 2147483647, %v2160
    %vm2172 = vcmp.eq.f32.partialorder %v2171, 8.507059e+37
    %v2173 = vand.u32 %v2160, 2147483648
    %v2174 = vor.u32 1.1754944e-38, %v2173
    %v2175 = vsel %vm2172, %v2174, %v2170
    %v2176 = vmul.f32 1.0, %v2175
    %v2177 = vrcp.pop %v2161
    %v2178 = vmul.f32 %v2161, %v2177
    %v2179 = vsub.f32 1.0, %v2178
    %v2180 = vmul.f32 %v2177, %v2179
    %v2181 = vadd.f32 %v2177, %v2180
    %vm2182 = vweird.f32 %v2161
    %vm2183 = vweird.f32 %v2177
    %vm2184 = vmor %vm2182, %vm2183
    %v2185 = vsel %vm2184, %v2177, %v2181
    %v2186 = vand.u32 2147483647, %v2161
    %vm2187 = vcmp.eq.f32.partialorder %v2186, 8.507059e+37
    %v2188 = vand.u32 %v2161, 2147483648
    %v2189 = vor.u32 1.1754944e-38, %v2188
    %v2190 = vsel %vm2187, %v2189, %v2185
    %v2191 = vmul.f32 1.0, %v2190
    %v2192 = vxor.u32 %v2151, 2147483648
    %v2193 = vxor.u32 %v2153, 2147483648
    %v2194 = vmul.f32 %v2192, 1.442695
    %v2195 = vpow.pop %v2194
    %v2196 = vmul.f32 %v2193, 1.442695
    %v2197 = vpow.pop %v2196
    %v2198 = vadd.f32 %v2195, 1.0
    %v2199 = vadd.f32 %v2197, 1.0
    %v2200 = vrcp.pop %v2198
    %v2201 = vmul.f32 %v2198, %v2200
    %v2202 = vsub.f32 1.0, %v2201
    %v2203 = vmul.f32 %v2200, %v2202
    %v2204 = vadd.f32 %v2200, %v2203
    %vm2205 = vweird.f32 %v2198
    %vm2206 = vweird.f32 %v2200
    %vm2207 = vmor %vm2205, %vm2206
    %v2208 = vsel %vm2207, %v2200, %v2204
    %v2209 = vand.u32 2147483647, %v2198
    %vm2210 = vcmp.eq.f32.partialorder %v2209, 8.507059e+37
    %v2211 = vand.u32 %v2198, 2147483648
    %v2212 = vor.u32 1.1754944e-38, %v2211
    %v2213 = vsel %vm2210, %v2212, %v2208
    %v2214 = vmul.f32 1.0, %v2213
    %v2215 = vrcp.pop %v2199
    %v2216 = vmul.f32 %v2199, %v2215
    %v2217 = vsub.f32 1.0, %v2216
    %v2218 = vmul.f32 %v2215, %v2217
    %v2219 = vadd.f32 %v2215, %v2218
    %vm2220 = vweird.f32 %v2199
    %vm2221 = vweird.f32 %v2215
    %vm2222 = vmor %vm2220, %vm2221
    %v2223 = vsel %vm2222, %v2215, %v2219
    %v2224 = vand.u32 2147483647, %v2199
    %vm2225 = vcmp.eq.f32.partialorder %v2224, 8.507059e+37
    %v2226 = vand.u32 %v2199, 2147483648
    %v2227 = vor.u32 1.1754944e-38, %v2226
    %v2228 = vsel %vm2225, %v2227, %v2223
    %v2229 = vmul.f32 1.0, %v2228
    %v2231 = vrot.slane %v2051, 2
    %v2232 = vrot.slane %v2051, 3
    %v2235 = vmul.f32 %v2176, %v2231
    %v2236 = vmul.f32 %v2191, %v2232
    %v2237 = vadd.f32 %v2136, %v2235
    %v2238 = vadd.f32 %v2139, %v2236
    %v2239 = vtanh.pop %v2237
    %v2240 = vtanh.pop %v2238
    %v2241 = vsub.f32 1.0, %v2214
    %v2242 = vsub.f32 1.0, %v2229
    %v2243 = vmul.f32 %v2241, %v2239
    %v2244 = vmul.f32 %v2242, %v2240
    %v2245 = vrot.slane %v1985, 7
    %v2246 = vrot.slane %v1986, 7
    %v2249 = vmul.f32 %v2214, %v2245
    %v2250 = vmul.f32 %v2229, %v2246
    %v2251 = vadd.f32 %v2243, %v2249
    %v2252 = vadd.f32 %v2244, %v2250
    %v2255 = vrot.slane %v2251, 7
    %v2256 = vrot.slane %v2252, 7
    %vm2259 = vcmask 1040384
    %v2260 = vsel %vm2259, 0.0, %v917
    %v2261 = vsel %vm2259, 0.0, %v667
    %vm2262 = vcmask 1041408
    %v2263 = vsel %vm2262, %v2260, %v1181
    %v2264 = vsel %vm2262, %v2261, %v1182
    %vm2265 = vcmask 1042432
    %v2266 = vsel %vm2265, %v2263, %v1447
    %v2267 = vsel %vm2265, %v2264, %v1448
    %vm2268 = vcmask 1043456
    %v2269 = vsel %vm2268, %v2266, %v1713
    %v2270 = vsel %vm2268, %v2267, %v1714
    %vm2271 = vcmask 1044480
    %v2272 = vsel %vm2271, %v2269, %v1979
    %v2273 = vsel %vm2271, %v2270, %v1980
    %vm2274 = vcmask 1045504
    %v2275 = vsel %vm2274, %v2272, %v2245
    %v2276 = vsel %vm2274, %v2273, %v2246
    %vm2277 = vcmask 1046528
    %v2278 = vsel %vm2277, %v2275, %v2255
    %v2279 = vsel %vm2277, %v2276, %v2256
    %2280 = vst [vmem:[#allocation15] sm:$0xff] %v2278
    %2281 = vst [vmem:[#allocation15 + $0x8] sm:$0xff] %v2279
    %v2282 = vld [vmem:[#allocation13] sm:$0xff]
    %v2283 = vld [vmem:[#allocation13 + $0x8] sm:$0xff]
    %v2284 = vld [vmem:[#allocation13 + $0x10] sm:$0xff]
    %v2285 = vld [vmem:[#allocation13 + $0x18] sm:$0xff]
    %v2286 = vld [vmem:[#allocation13 + $0x20] sm:$0xff]
    %v2287 = vld [vmem:[#allocation13 + $0x28] sm:$0xff]
    %v2288 = vld [vmem:[#allocation13 + $0x30] sm:$0xff]
    %v2289 = vld [vmem:[#allocation13 + $0x38] sm:$0xff]
    %v2290 = vld [vmem:[#allocation13 + $0x40] sm:$0xff]
    %v2291 = vld [vmem:[#allocation13 + $0x48] sm:$0xff]
    %v2292 = vld [vmem:[#allocation13 + $0x50] sm:$0xff]
    %v2293 = vld [vmem:[#allocation13 + $0x58] sm:$0xff]
    %v2294 = vld [vmem:[#allocation13 + $0x60] sm:$0xff]
    %v2295 = vld [vmem:[#allocation13 + $0x68] sm:$0xff]
    %v2296 = vld [vmem:[#allocation13 + $0x70] sm:$0xff]
    %v2297 = vld [vmem:[#allocation13 + $0x78] sm:$0xff]
    %v2298 = vld [vmem:[%s7] sm:$0x1]
    %v2300 = vperm.slane %v2298, 0
    %2302 = vmatpush.msra.mxu0 %v2297
    %2303 = vmatpush.msra.mxu0 %v2296
    %2304 = vmatpush.msra.mxu0 %v2295
    %2305 = vmatpush.msra.mxu0 %v2294
    %2306 = vmatpush.msra.mxu0 %v2293
    %2307 = vmatpush.msra.mxu0 %v2292
    %2308 = vmatpush.msra.mxu0 %v2291
    %2309 = vmatpush.msra.mxu0 %v2290
    %2310 = vmatpush.msra.mxu0 %v2289
    %2311 = vmatpush.msra.mxu0 %v2288
    %2312 = vmatpush.msra.mxu0 %v2287
    %2313 = vmatpush.msra.mxu0 %v2286
    %2314 = vmatpush.msra.mxu0 %v2285
    %2315 = vmatpush.msra.mxu0 %v2284
    %2316 = vmatpush.msra.mxu0 %v2283
    %2317 = vmatpush.msra.mxu0 %v2282
    %2318 = vmatmul.f32.gmra.mxu0 %v2278
    %v2319 = vpop.f32.mrf.mxu0
    %v2320 = vadd.f32 %v2300, %v2319
    %2321 = vmatmul.f32.gmra.mxu0 %v2279
    %v2322 = vpop.f32.mrf.mxu0
    %v2323 = vadd.f32 %v2300, %v2322
    %2324 = vdwg.mxu0
    %v2325 = vlaneseq
    %v2326 = vshrl.u32 %v2325, 7
    %vm2327 = vcmp.eq.s32.totalorder %v2326, 0
    %v2328 = vsel %vm2327, %v136, %v2320
    %v2329 = vsel %vm2327, %v137, %v2323
    %2330 = vst [vmem:[#allocation14] sm:$0xff] %v2328
    %2331 = vst [vmem:[#allocation14 + $0x8] sm:$0xff] %v2329
    // Predicated region
    $region62: #{tpu_custom_call.1} parent=1 // pred_check
      _
    $region63: #{tpu_custom_call.1} parent=1 // pred_check_branch
      %2333 = sbr.rel (0) target = $region65
    $region64: #{tpu_custom_call.1} parent=1 // pred_region
      %2335 = vsyncadd [#allocation4], 0
      %s2336 = sshll.u32 [#allocation14], 4
      %s2337 = int_to_ptr.vmem [resolvable:$true] %s2336
      %s2338 = sshll.u32 %s8, 4
      %s2339 = int_to_ptr.hbm [resolvable:$true] %s2338
      %2344 = dma.vmem_to_hbm [thread:$0]  %s2337, 256, %s2339, [#allocation4], 128, 128, 8
    $region65: #{tpu_custom_call.1} parent=1 // pred_fallthru
      _
    // Predicated region
    $region66: #{tpu_custom_call.1} parent=1 // pred_check
      _
    $region67: #{tpu_custom_call.1} parent=1 // pred_check_branch
      %2346 = sbr.rel (0) target = $region69
    $region68: #{tpu_custom_call.1} parent=1 // pred_region
      %2348 = vsyncadd [#allocation16], 0
      %s2349 = sshll.u32 [#allocation15], 4
      %s2350 = int_to_ptr.vmem [resolvable:$true] %s2349
      %s2351 = sshll.u32 %s9, 4
      %s2352 = int_to_ptr.hbm [resolvable:$true] %s2351
      %2357 = dma.vmem_to_hbm [thread:$0]  %s2350, 256, %s2352, [#allocation16], 128, 128, 8
    $region69: #{tpu_custom_call.1} parent=1 // pred_fallthru
      _
    // Predicated region
    $region70: #{tpu_custom_call.1} parent=1 // pred_check
      _
    $region71: #{tpu_custom_call.1} parent=1 // pred_check_branch
      %2359 = sbr.rel (0) target = $region73
    $region72: #{tpu_custom_call.1} parent=1 // pred_region
      %2361 = dma.done [#allocation4], 256
    $region73: #{tpu_custom_call.1} parent=1 // pred_fallthru
      _
    // Predicated region
    $region74: #{tpu_custom_call.1} parent=1 // pred_check
      _
    $region75: #{tpu_custom_call.1} parent=1 // pred_check_branch
      %2363 = sbr.rel (0) target = $region77
    $region76: #{tpu_custom_call.1} parent=1 // pred_region
      %2365 = dma.done [#allocation16], 256
    $region77: #{tpu_custom_call.1} parent=1 // pred_fallthru
      _
    %2366 = vsyncpa [#allocation3], 1
    %2367 = vsyncpa [#allocation6], 1
    %2368 = vsyncpa [#allocation9], 1
    %2369 = vsyncpa [#allocation12], 1
    %2370 = vsyncpa [#allocation4], 1
    %2371 = vsyncpa [#allocation16], 1

</llo_original>
